<compile_context>
chip_gen: v7x
topology: tpu7x:2x2x1
jax: 0.10.0
libtpu: 0.0.40
codegen_flags: <defaults>
</compile_context>

<pallas_src>
import functools
import math

import jax
import jax.numpy as jnp
from jax.experimental import pallas as pl
from jax.experimental.pallas import tpu as pltpu


# ----------------------------------------------------------------------------
# small utilities
# ----------------------------------------------------------------------------
def _round_up(x, m):
    return (x + m - 1) // m * m


_TN_DEFAULT = None


def _tn_default():
    """MXU-native N tile: 256 on v6e/v7x, 128 on v5e and older."""
    global _TN_DEFAULT
    if _TN_DEFAULT is None:
        try:
            kind = jax.devices()[0].device_kind.lower()
            if any(t in kind for t in ("v2", "v3", "v4", "v5")):
                _TN_DEFAULT = 128
            else:
                _TN_DEFAULT = 256
        except Exception:
            _TN_DEFAULT = 128
    return _TN_DEFAULT


def _apply_act(x, act):
    if act == "relu":
        return jnp.maximum(x, 0.0)
    if act == "leaky":
        return jnp.where(x >= 0, x, 0.2 * x)
    if act == "sigmoid":
        return jax.nn.sigmoid(x)
    if act == "tanh":
        return jnp.tanh(x)
    return x


# ----------------------------------------------------------------------------
# Pallas kernel 1: tiled matmul with fused conv epilogue
#   - bf16 operands, f32 accumulation on the MXU
#   - output written (and epilogue applied) only on the final K step
#   - optional per-row scale (partial-conv renorm), per-channel bias, activation
# ----------------------------------------------------------------------------
def _make_fused_mm_kernel(act, has_rs, has_scale, has_shift):
    def kernel(*refs):
        idx = 0
        a_ref = refs[idx]; idx += 1
        b_ref = refs[idx]; idx += 1
        rs_ref = scale_ref = shift_ref = None
        if has_rs:
            rs_ref = refs[idx]; idx += 1
        if has_scale:
            scale_ref = refs[idx]; idx += 1
        if has_shift:
            shift_ref = refs[idx]; idx += 1
        o_ref = refs[idx]; idx += 1
        acc_ref = refs[idx]

        @pl.when(pl.program_id(2) == 0)
        def _():
            acc_ref[...] = jnp.zeros_like(acc_ref)

        acc_ref[...] += jnp.dot(a_ref[...], b_ref[...],
                                preferred_element_type=jnp.float32)

        # Only materialize the output tile (and the fused epilogue) on the
        # final K step -> no redundant VMEM/HBM store per reduction step.
        @pl.when(pl.program_id(2) == pl.num_programs(2) - 1)
        def _():
            x = acc_ref[...]
            if has_rs:
                x = x * rs_ref[...]          # (tm, 1) broadcast: pconv renorm
            if has_scale:
                x = x * scale_ref[...]       # (1, tn) broadcast
            if has_shift:
                x = x + shift_ref[...]       # (1, tn) broadcast: bias
            o_ref[...] = _apply_act(x, act).astype(o_ref.dtype)

    return kernel


def fused_matmul(a, b, *, row_scale=None, scale=None, shift=None,
                 act="linear", out_dtype=jnp.float32, keep_padded=False):
    """(M, K) @ (K, N); operands cast to bf16, f32 accumulation, fused epilogue."""
    M, K = a.shape
    K2, N = b.shape
    assert K == K2
    tm = min(512, _round_up(M, 8))
    tk = min(512, _round_up(K, 128))
    tn = min(_tn_default(), _round_up(N, 128))
    Mp, Kp, Np = _round_up(M, tm), _round_up(K, tk), _round_up(N, tn)

    a_p = jnp.pad(a.astype(jnp.bfloat16), ((0, Mp - M), (0, Kp - K)))
    b_p = jnp.pad(b.astype(jnp.bfloat16), ((0, Kp - K), (0, Np - N)))

    has_rs = row_scale is not None
    has_scale = scale is not None
    has_shift = shift is not None

    operands = [a_p, b_p]
    in_specs = [pl.BlockSpec((tm, tk), lambda i, j, k: (i, k)),
                pl.BlockSpec((tk, tn), lambda i, j, k: (k, j))]
    if has_rs:
        rs_p = jnp.pad(row_scale.astype(jnp.float32).reshape(M, 1),
                       ((0, Mp - M), (0, 0)))
        operands.append(rs_p)
        in_specs.append(pl.BlockSpec((tm, 1), lambda i, j, k: (i, 0)))
    if has_scale:
        sc_p = jnp.pad(scale.astype(jnp.float32), (0, Np - N)).reshape(1, Np)
        operands.append(sc_p)
        in_specs.append(pl.BlockSpec((1, tn), lambda i, j, k: (0, j)))
    if has_shift:
        sh_p = jnp.pad(shift.astype(jnp.float32), (0, Np - N)).reshape(1, Np)
        operands.append(sh_p)
        in_specs.append(pl.BlockSpec((1, tn), lambda i, j, k: (0, j)))

    out = pl.pallas_call(
        _make_fused_mm_kernel(act, has_rs, has_scale, has_shift),
        out_shape=jax.ShapeDtypeStruct((Mp, Np), out_dtype),
        grid_spec=pltpu.PrefetchScalarGridSpec(
            num_scalar_prefetch=0,
            grid=(Mp // tm, Np // tn, Kp // tk),
            in_specs=in_specs,
            out_specs=pl.BlockSpec((tm, tn), lambda i, j, k: (i, j)),
            scratch_shapes=[pltpu.VMEM((tm, tn), jnp.float32)],
        ),
        compiler_params=pltpu.CompilerParams(
            dimension_semantics=("parallel", "parallel", "arbitrary")),
    )(*operands)
    if keep_padded:
        return out, (M, N)
    return out[:M, :N]


# ----------------------------------------------------------------------------
# Pallas kernel 2: per-channel scale/shift + activation (BN epilogue)
# works directly on the padded matmul output -> no extra pad/slice round trip
# ----------------------------------------------------------------------------
def _ssact_kernel(x_ref, scale_ref, shift_ref, o_ref, *, act):
    o_ref[...] = _apply_act(x_ref[...] * scale_ref[...] + shift_ref[...], act)


def scale_shift_act_padded(xp, scale_p, shift_p, act="linear"):
    Mp, Cp = xp.shape
    tm = min(512, Mp)
    return pl.pallas_call(
        functools.partial(_ssact_kernel, act=act),
        out_shape=jax.ShapeDtypeStruct((Mp, Cp), jnp.float32),
        grid=(Mp // tm,),
        in_specs=[pl.BlockSpec((tm, Cp), lambda i: (i, 0)),
                  pl.BlockSpec((1, Cp), lambda i: (0, 0)),
                  pl.BlockSpec((1, Cp), lambda i: (0, 0))],
        out_specs=pl.BlockSpec((tm, Cp), lambda i: (i, 0)),
        compiler_params=pltpu.CompilerParams(
            dimension_semantics=("parallel",)),
    )(xp, scale_p.reshape(1, Cp), shift_p.reshape(1, Cp))


# ----------------------------------------------------------------------------
# Pallas kernel 3: fused per-channel sum / sum-of-squares (BatchNorm stats)
# single pass over the (padded) activation instead of two jnp.mean passes
# ----------------------------------------------------------------------------
def _stats_kernel(x_ref, sum_ref, ssq_ref, acc_s, acc_q):
    @pl.when(pl.program_id(0) == 0)
    def _():
        acc_s[...] = jnp.zeros_like(acc_s)
        acc_q[...] = jnp.zeros_like(acc_q)

    x = x_ref[...]
    acc_s[...] += jnp.sum(x, axis=0, keepdims=True)
    acc_q[...] += jnp.sum(x * x, axis=0, keepdims=True)

    @pl.when(pl.program_id(0) == pl.num_programs(0) - 1)
    def _():
        sum_ref[...] = acc_s[...]
        ssq_ref[...] = acc_q[...]


def channel_sum_sumsq(xp):
    Mp, Cp = xp.shape
    tm = min(512, Mp)
    s, q = pl.pallas_call(
        _stats_kernel,
        out_shape=(jax.ShapeDtypeStruct((1, Cp), jnp.float32),
                   jax.ShapeDtypeStruct((1, Cp), jnp.float32)),
        grid=(Mp // tm,),
        in_specs=[pl.BlockSpec((tm, Cp), lambda i: (i, 0))],
        out_specs=(pl.BlockSpec((1, Cp), lambda i: (0, 0)),
                   pl.BlockSpec((1, Cp), lambda i: (0, 0))),
        scratch_shapes=[pltpu.VMEM((1, Cp), jnp.float32),
                        pltpu.VMEM((1, Cp), jnp.float32)],
        compiler_params=pltpu.CompilerParams(
            dimension_semantics=("arbitrary",)),
    )(xp)
    return s[0], q[0]


# ----------------------------------------------------------------------------
# Pallas kernel 4: fused add + activation (bottleneck residual)
# ----------------------------------------------------------------------------
def _add_act_kernel(a_ref, b_ref, o_ref, *, act):
    o_ref[...] = _apply_act(a_ref[...] + b_ref[...], act)


def add_act(a, b, act):
    N, H, W, C = a.shape
    M = N * H * W
    tm = min(512, _round_up(M, 8))
    Mp, Cp = _round_up(M, tm), _round_up(C, 128)
    ap = jnp.pad(a.reshape(M, C), ((0, Mp - M), (0, Cp - C)))
    bp = jnp.pad(b.reshape(M, C), ((0, Mp - M), (0, Cp - C)))
    out = pl.pallas_call(
        functools.partial(_add_act_kernel, act=act),
        out_shape=jax.ShapeDtypeStruct((Mp, Cp), jnp.float32),
        grid=(Mp // tm,),
        in_specs=[pl.BlockSpec((tm, Cp), lambda i: (i, 0)),
                  pl.BlockSpec((tm, Cp), lambda i: (i, 0))],
        out_specs=pl.BlockSpec((tm, Cp), lambda i: (i, 0)),
        compiler_params=pltpu.CompilerParams(
            dimension_semantics=("parallel",)),
    )(ap, bp)
    return out[:M, :C].reshape(N, H, W, C)


# ----------------------------------------------------------------------------
# Pallas kernel 5: row softmax with temperature (CFA attention)
# ----------------------------------------------------------------------------
def _softmax_kernel(x_ref, o_ref, *, scale):
    x = x_ref[...] * scale
    m = jnp.max(x, axis=-1, keepdims=True)
    e = jnp.exp(x - m)
    o_ref[...] = e / jnp.sum(e, axis=-1, keepdims=True)


def softmax_scaled(x, scale):
    M, L = x.shape
    tm = min(256, _round_up(M, 8))
    Mp, Lp = _round_up(M, tm), _round_up(L, 128)
    # -1e30 * scale stays finite in f32 for the scales used here (<= 10).
    xp = jnp.pad(x, ((0, Mp - M), (0, Lp - L)), constant_values=-1e30)
    out = pl.pallas_call(
        functools.partial(_softmax_kernel, scale=float(scale)),
        out_shape=jax.ShapeDtypeStruct((Mp, Lp), jnp.float32),
        grid=(Mp // tm,),
        in_specs=[pl.BlockSpec((tm, Lp), lambda i: (i, 0))],
        out_specs=pl.BlockSpec((tm, Lp), lambda i: (i, 0)),
        compiler_params=pltpu.CompilerParams(
            dimension_semantics=("parallel",)),
    )(xp)
    return out[:M, :L]


# ----------------------------------------------------------------------------
# convolution helpers (im2col glue + fused Pallas matmul)
# ----------------------------------------------------------------------------
def _extract_patches(x, kh, kw, stride, pad, dilation=1, dtype=jnp.bfloat16):
    """x: NHWC -> patches (N, OH, OW, kh*kw*C), flattened as ((kh,kw),C).
    Patches are materialized in bf16 to halve the duplicated im2col traffic."""
    N, H, W, C = x.shape
    x = x.astype(dtype)
    xp = jnp.pad(x, ((0, 0), (pad, pad), (pad, pad), (0, 0)))
    Hp, Wp = H + 2 * pad, W + 2 * pad
    OH = (Hp - dilation * (kh - 1) - 1) // stride + 1
    OW = (Wp - dilation * (kw - 1) - 1) // stride + 1
    cols = []
    for i in range(kh):
        for j in range(kw):
            r0, c0 = i * dilation, j * dilation
            cols.append(xp[:, r0:r0 + (OH - 1) * stride + 1:stride,
                           c0:c0 + (OW - 1) * stride + 1:stride, :])
    return jnp.concatenate(cols, axis=-1), OH, OW


def _weight_to_mat(w):
    # w: (OC, IC, KH, KW) -> (KH*KW*IC, OC), matching _extract_patches order.
    OC, IC, KH, KW = w.shape
    return jnp.transpose(w, (2, 3, 1, 0)).reshape(KH * KW * IC, OC)


def conv2d(x, w, b, stride=1, padding=0, dilation=1, act="linear"):
    OC, IC, KH, KW = w.shape
    patches, OH, OW = _extract_patches(x, KH, KW, stride, padding, dilation)
    N = x.shape[0]
    A = patches.reshape(N * OH * OW, KH * KW * IC)
    out = fused_matmul(A, _weight_to_mat(w), shift=b, act=act)   # bias+act fused
    return out.reshape(N, OH, OW, OC)


def _mask_window_sum(m, kh, kw, stride, pad):
    """Mask convolution with an all-ones (OC,IC,kh,kw) kernel, computed as a
    cheap shifted-slice box-sum on the channel-summed mask (no im2col, no
    degenerate N=1 matmul). Returns (N, OH, OW, 1)."""
    N, H, W, _ = m.shape
    mc = jnp.sum(m.astype(jnp.float32), axis=-1, keepdims=True)
    mp = jnp.pad(mc, ((0, 0), (pad, pad), (pad, pad), (0, 0)))
    Hp, Wp = H + 2 * pad, W + 2 * pad
    OH = (Hp - kh) // stride + 1
    OW = (Wp - kw) // stride + 1
    s = jnp.zeros((N, OH, OW, 1), jnp.float32)
    for i in range(kh):
        for j in range(kw):
            s = s + mp[:, i:i + (OH - 1) * stride + 1:stride,
                       j:j + (OW - 1) * stride + 1:stride, :]
    return s, OH, OW


SAMPLE_CFG = {"down-7": (7, 2, 3), "down-5": (5, 2, 2),
              "down-3": (3, 2, 1), "none-3": (3, 1, 1)}


def pconv_bn_activ(p, x, m):
    """PartialConv2d(bias=False) + optional BatchNorm2d (batch stats) + activation.
    Mask renorm (and, for bn=False, the activation) is fused into the matmul's
    final-K write; BN stats use one fused Pallas sum/sumsq pass."""
    w = p["w"]
    stride, pad = p["stride"], p["pad"]
    OC, IC, KH, KW = w.shape
    winsize = float(KH * KW * IC)
    N = x.shape[0]

    msum, OH, OW = _mask_window_sum(m, KH, KW, stride, pad)
    um = jnp.clip(msum, 0.0, 1.0)                           # updated mask
    row_scale = (winsize / (msum + 1e-8)) * um              # pconv renorm factor
    new_mask = jnp.broadcast_to(um, (N, OH, OW, OC))
    M = N * OH * OW

    patches, _, _ = _extract_patches(x * m, KH, KW, stride, pad)
    A = patches.reshape(M, KH * KW * IC)
    Wmat = _weight_to_mat(w)

    if not p["bn"]:
        out = fused_matmul(A, Wmat, row_scale=row_scale.reshape(M, 1),
                           act=p["activ"])
        return out.reshape(N, OH, OW, OC), new_mask

    # keep the renormalised conv output padded so the BN stats and the
    # scale/shift/act passes avoid extra pad/slice round trips
    outp, _ = fused_matmul(A, Wmat, row_scale=row_scale.reshape(M, 1),
                           act="linear", keep_padded=True)
    Mp, Cp = outp.shape
    s, q = channel_sum_sumsq(outp)                          # single fused pass
    mean = s / M
    var = jnp.maximum(q / M - mean * mean, 0.0)
    gamma = jnp.pad(p["gamma"], (0, Cp - OC))
    beta = jnp.pad(p["beta"], (0, Cp - OC))
    scale = gamma / jnp.sqrt(var + 1e-5)
    shift = beta - mean * scale
    outp = scale_shift_act_padded(outp, scale, shift, act=p["activ"])
    return outp[:M, :OC].reshape(N, OH, OW, OC), new_mask


# ----------------------------------------------------------------------------
# resizing (glue)
# ----------------------------------------------------------------------------
def upsample_bilinear2x(x):
    N, H, W, C = x.shape
    # matches F.interpolate(scale_factor=2, mode='bilinear', align_corners=False)
    return jax.image.resize(x, (N, 2 * H, 2 * W, C), method="bilinear")


def upsample_nearest2x(x):
    return jnp.repeat(jnp.repeat(x, 2, axis=1), 2, axis=2)


# ----------------------------------------------------------------------------
# sub-modules: Bottleneck, projections, BiGFF, CFA
# ----------------------------------------------------------------------------
def bottleneck(p, x):
    residual = conv2d(x, p["conv4"]["w"], p["conv4"]["b"], 1, 0)
    out = conv2d(x, p["conv1"]["w"], p["conv1"]["b"], 1, 1, act="leaky")
    out = conv2d(out, p["conv2"]["w"], p["conv2"]["b"], 1, 1, act="leaky")
    out = conv2d(out, p["conv3"]["w"], p["conv3"]["b"], 1, 1)
    return add_act(out, residual, "leaky")


def feature_projection(p, x, act):
    y = bottleneck(p["bottleneck"], x)
    return conv2d(y, p["out"]["w"], p["out"]["b"], 1, 0, act=act)


def bigff(p, texture, structure):
    energy = jnp.concatenate([texture, structure], axis=-1)
    g_s2t = conv2d(energy, p["structure_gate"]["w"], p["structure_gate"]["b"],
                   1, 1, act="sigmoid")
    g_t2s = conv2d(energy, p["texture_gate"]["w"], p["texture_gate"]["b"],
                   1, 1, act="sigmoid")
    texture = texture + p["texture_gamma"] * (g_s2t * structure)
    structure = structure + p["structure_gamma"] * (g_t2s * texture)
    return jnp.concatenate([texture, structure], axis=-1)


def _fold(cols, out_hw, k, stride, pad):
    """col2im: cols (N, Hq, Wq, k, k, C) -> (N, out_hw, out_hw, C).
    Equivalent to F.conv_transpose2d with the raw patches as kernels."""
    N, Hq, Wq = cols.shape[:3]
    C = cols.shape[-1]
    Hp = (Hq - 1) * stride + k
    out = jnp.zeros((N, Hp, Hp, C), jnp.float32)
    for i in range(k):
        for j in range(k):
            out = out.at[:, i:i + (Hq - 1) * stride + 1:stride,
                          j:j + (Wq - 1) * stride + 1:stride, :].add(
                              cols[:, :, :, i, j, :].astype(jnp.float32))
    return out[:, pad:pad + out_hw, pad:pad + out_hw, :]


def cfa(p, f, b, ksize=3, rate=2, softmax_scale=10.0):
    """Contextual Feature Aggregation (patch attention + multi-dilation fusion)."""
    N, H, W, C = f.shape
    k_raw = 2 * rate
    pad_raw = ((-(-H // rate) - 1) * rate + k_raw - H) // 2  # 'same' padding
    raw_patches, Hb, Wb = _extract_patches(b, k_raw, k_raw, rate, pad_raw)

    f_low = f[:, ::rate, ::rate, :]
    b_low = b[:, ::rate, ::rate, :]
    Hl, Wl = f_low.shape[1:3]
    L = Hl * Wl
    w_patches, _, _ = _extract_patches(b_low, ksize, ksize, 1, ksize // 2,
                                       dtype=jnp.float32)
    f_patches, _, _ = _extract_patches(f_low, ksize, ksize, 1, ksize // 2)

    # TODO(synk): the per-sample loop could be batched via a leading grid axis;
    #             left as a loop since N=1 here (the reference divides by a
    #             constant 4, matching conv_transpose2d(...)/4. in CTSDG).
    ys = []
    for n in range(N):
        wn = w_patches[n].reshape(L, ksize * ksize * C)
        wn_normed = wn / jnp.sqrt(jnp.sum(wn * wn, axis=1, keepdims=True) + 1e-4)
        fn = f_patches[n].reshape(Hl * Wl, ksize * ksize * C)
        scores = fused_matmul(fn, wn_normed.T)                  # (HWq, L) on MXU
        attn = softmax_scaled(scores, softmax_scale)            # Pallas softmax
        rawn = raw_patches[n].reshape(L, k_raw * k_raw * C)
        recon = fused_matmul(attn, rawn)                        # (HWq, k*k*C)
        cols = recon.reshape(1, Hl, Wl, k_raw, k_raw, C)
        ys.append(_fold(cols, H, k_raw, rate, 1) / 4.0)
    y = jnp.concatenate(ys, axis=0)

    branches = []
    for i in range(4):
        d = 2 ** i
        branches.append(conv2d(y, p[f"conv{i}"]["w"], p[f"conv{i}"]["b"],
                               stride=1, padding=d, dilation=d, act="relu"))
    y = jnp.concatenate(branches, axis=-1)
    return conv2d(y, p["fusion"]["w"], p["fusion"]["b"], 1, 0, act="relu")


# ----------------------------------------------------------------------------
# parameter construction (deterministic, gaussian(0, 0.02) like weights_init)
# ----------------------------------------------------------------------------
def init_generator_params(key):
    keys = iter(jax.random.split(key, 256))

    def nk():
        return next(keys)

    def conv_p(oc, ic, k):
        return {"w": 0.02 * jax.random.normal(nk(), (oc, ic, k, k), jnp.float32),
                "b": jnp.zeros((oc,), jnp.float32)}

    def pconv_p(ic, oc, bn=True, sample="none-3", activ="relu"):
        ksz, s, pad = SAMPLE_CFG[sample]
        d = {"w": 0.02 * jax.random.normal(nk(), (oc, ic, ksz, ksz), jnp.float32),
             "stride": s, "pad": pad, "bn": bn, "activ": activ}
        if bn:
            d["gamma"] = jnp.ones((oc,), jnp.float32)
            d["beta"] = jnp.zeros((oc,), jnp.float32)
        return d

    def bottleneck_p(ic, oc):
        return {"conv1": conv_p(oc, ic, 3), "conv2": conv_p(oc, oc, 3),
                "conv3": conv_p(oc, oc, 3), "conv4": conv_p(oc, ic, 1)}

    P = {}
    enc_cfg = [(None, None), (None, 64), (64, 128), (128, 256), (256, 512),
               (512, 512), (512, 512), (512, 512)]
    enc_sample = [None, "down-7", "down-5", "down-5", "down-3",
                  "down-3", "down-3", "down-3"]
    for i in range(1, 8):
        ic = 1 if i == 1 else enc_cfg[i][0]
        P[f"ec_texture_{i}"] = pconv_p(ic, enc_cfg[i][1], bn=(i != 1),
                                       sample=enc_sample[i])
    for i in range(1, 8):
        ic = 2 if i == 1 else enc_cfg[i][0]
        P[f"ec_structure_{i}"] = pconv_p(ic, enc_cfg[i][1], bn=(i != 1),
                                         sample=enc_sample[i])

    dec_cfg = {7: (1024, 512), 6: (1024, 512), 5: (1024, 512), 4: (768, 256),
               3: (384, 128), 2: (192, 64)}
    for i in range(7, 1, -1):
        P[f"dc_texture_{i}"] = pconv_p(*dec_cfg[i], activ="leaky")
        P[f"dc_structure_{i}"] = pconv_p(*dec_cfg[i], activ="leaky")
    P["dc_texture_1"] = pconv_p(64 + 1, 64, activ="leaky")
    P["dc_structure_1"] = pconv_p(64 + 2, 64, activ="leaky")

    P["texture_proj"] = {"bottleneck": bottleneck_p(64, 64), "out": conv_p(1, 64, 1)}
    P["structure_proj"] = {"bottleneck": bottleneck_p(64, 64), "out": conv_p(1, 64, 1)}
    P["bigff"] = {"structure_gate": conv_p(64, 128, 3),
                  "texture_gate": conv_p(64, 128, 3),
                  "structure_gamma": jnp.zeros((), jnp.float32),
                  "texture_gamma": jnp.zeros((), jnp.float32)}
    P["fusion1"] = conv_p(64, 128, 3)
    P["cfa"] = {f"conv{i}": conv_p(64, 64, 3) for i in range(4)}
    P["cfa"]["fusion"] = conv_p(64, 256, 1)
    P["fusion2"] = conv_p(64, 128, 3)
    P["out_layer"] = conv_p(1, 64 + 64 + 64, 1)
    return P


# ----------------------------------------------------------------------------
# Generator forward
# ----------------------------------------------------------------------------
def generator_forward(params, input_image, input_edge, mask):
    # NCHW -> NHWC
    img = jnp.transpose(input_image, (0, 2, 3, 1)).astype(jnp.float32)
    edge = jnp.transpose(input_edge, (0, 2, 3, 1)).astype(jnp.float32)
    m = jnp.transpose(mask, (0, 2, 3, 1)).astype(jnp.float32)

    ec_t, ec_t_m = {0: img}, {0: m}
    for i in range(1, 8):
        ec_t[i], ec_t_m[i] = pconv_bn_activ(params[f"ec_texture_{i}"],
                                            ec_t[i - 1], ec_t_m[i - 1])

    ec_s, ec_s_m = {0: edge}, {0: jnp.concatenate([m, m], axis=-1)}
    for i in range(1, 8):
        ec_s[i], ec_s_m[i] = pconv_bn_activ(params[f"ec_structure_{i}"],
                                            ec_s[i - 1], ec_s_m[i - 1])

    # texture decoder starts from the STRUCTURE encoder bottleneck (cross-branch)
    dc_t, dc_t_m = ec_s[7], ec_s_m[7]
    for i in range(7, 0, -1):
        dc_t = upsample_bilinear2x(dc_t)
        dc_t_m = upsample_nearest2x(dc_t_m)
        dc_t = jnp.concatenate([dc_t, ec_t[i - 1]], axis=-1)
        dc_t_m = jnp.concatenate([dc_t_m, ec_t_m[i - 1]], axis=-1)
        dc_t, dc_t_m = pconv_bn_activ(params[f"dc_texture_{i}"], dc_t, dc_t_m)

    # structure decoder starts from the TEXTURE encoder bottleneck
    dc_s, dc_s_m = ec_t[7], ec_t_m[7]
    for i in range(7, 0, -1):
        dc_s = upsample_bilinear2x(dc_s)
        dc_s_m = upsample_nearest2x(dc_s_m)
        dc_s = jnp.concatenate([dc_s, ec_s[i - 1]], axis=-1)
        dc_s_m = jnp.concatenate([dc_s_m, ec_s_m[i - 1]], axis=-1)
        dc_s, dc_s_m = pconv_bn_activ(params[f"dc_structure_{i}"], dc_s, dc_s_m)

    projected_image = feature_projection(params["texture_proj"], dc_t, act="tanh")
    projected_edge = feature_projection(params["structure_proj"], dc_s, act="sigmoid")

    output_bigff = bigff(params["bigff"], dc_t, dc_s)                     # (N,H,W,128)
    output = conv2d(output_bigff, params["fusion1"]["w"], params["fusion1"]["b"],
                    stride=2, padding=1, act="leaky")                     # (N,H/2,W/2,64)
    output_atten = cfa(params["cfa"], output, output)
    output = conv2d(jnp.concatenate([output, output_atten], axis=-1),
                    params["fusion2"]["w"], params["fusion2"]["b"],
                    stride=1, padding=1, act="leaky")
    output = upsample_bilinear2x(output)
    output = conv2d(jnp.concatenate([output, output_bigff], axis=-1),
                    params["out_layer"]["w"], params["out_layer"]["b"],
                    stride=1, padding=0, act="tanh")

    # NHWC -> NCHW
    return (jnp.transpose(output, (0, 3, 1, 2)),
            jnp.transpose(projected_image, (0, 3, 1, 2)),
            jnp.transpose(projected_edge, (0, 3, 1, 2)))


# ----------------------------------------------------------------------------
# main
# ----------------------------------------------------------------------------
if __name__ == "__main__":
    key = jax.random.PRNGKey(0)
    pkey, k1, k2, k3 = jax.random.split(key, 4)
    params = init_generator_params(pkey)

    # smallest spatial size consistent with 7 stride-2 encoder stages: 128
    N, H, W = 1, 128, 128
    input_image = jax.random.normal(k1, (N, 1, H, W), jnp.float32)
    input_edge = jax.random.normal(k2, (N, 2, H, W), jnp.float32)
    mask = (jax.random.uniform(k3, (N, 1, H, W)) > 0.5).astype(jnp.float32)

    out, proj_img, proj_edge = generator_forward(params, input_image, input_edge, mask)
    out, proj_img, proj_edge = jax.block_until_ready((out, proj_img, proj_edge))

    assert out.shape == (N, 1, H, W)
    assert proj_img.shape == (N, 1, H, W)
    assert proj_edge.shape == (N, 1, H, W)
    assert jnp.all(jnp.isfinite(out)) and jnp.all(jnp.isfinite(proj_img)) \
        and jnp.all(jnp.isfinite(proj_edge))
    print("KERNEL_OK")
</pallas_src>

<mosaic_0001>
module attributes {stable_mosaic.version = 11 : i64} {
  func.func @kernel(%arg0: i32, %arg1: i32, %arg2: i32, %arg3: memref<512x128xbf16, #tpu.memory_space<vmem>>, %arg4: memref<128x128xbf16, #tpu.memory_space<vmem>>, %arg5: memref<512x1xf32, #tpu.memory_space<vmem>>, %arg6: memref<512x128xf32, #tpu.memory_space<vmem>>, %arg7: memref<512x128xf32, #tpu.memory_space<vmem>>) attributes {dimension_semantics = [#tpu.dimension_semantics<parallel>, #tpu.dimension_semantics<parallel>, #tpu.dimension_semantics<arbitrary>], iteration_bounds = array<i64: 8, 1, 1>, scalar_prefetch = 0 : i64, scratch_operands = 1 : i64, tpu.core_type = #tpu.core_type<tc>, window_params = [{transform_indices = @transform_0, window_bounds = array<i64: 512, 128>}, {transform_indices = @transform_1, window_bounds = array<i64: 128, 128>}, {transform_indices = @transform_2, window_bounds = array<i64: 512, 1>}, {transform_indices = @transform_3, window_bounds = array<i64: 512, 128>}]} {
    %c0_i32 = arith.constant 0 : i32
    %0 = arith.cmpi eq, %arg2, %c0_i32 : i32
    %1 = arith.extui %0 : i1 to i32
    %c0_i32_0 = arith.constant 0 : i32
    %2 = arith.cmpi ne, %1, %c0_i32_0 : i32
    scf.if %2 {
      %cst_10 = arith.constant 0.000000e+00 : f32
      %12 = vector.broadcast %cst_10 : f32 to vector<512x128xf32>
      %c0_11 = arith.constant 0 : index
      %c0_12 = arith.constant 0 : index
      %13 = vector.load %arg7[%c0_11, %c0_12] : memref<512x128xf32, #tpu.memory_space<vmem>>, vector<512x128xf32>
      tpu.vector_store %arg7[%c0_11, %c0_12], %12 {strides = array<i32>} : memref<512x128xf32, #tpu.memory_space<vmem>>, vector<512x128xf32>,
    } else {
    }
    %c0 = arith.constant 0 : index
    %c0_1 = arith.constant 0 : index
    %3 = vector.load %arg7[%c0, %c0_1] : memref<512x128xf32, #tpu.memory_space<vmem>>, vector<512x128xf32>
    %c0_2 = arith.constant 0 : index
    %c0_3 = arith.constant 0 : index
    %4 = vector.load %arg3[%c0_2, %c0_3] : memref<512x128xbf16, #tpu.memory_space<vmem>>, vector<512x128xbf16>
    %c0_4 = arith.constant 0 : index
    %c0_5 = arith.constant 0 : index
    %5 = vector.load %arg4[%c0_4, %c0_5] : memref<128x128xbf16, #tpu.memory_space<vmem>>, vector<128x128xbf16>
    %cst = arith.constant dense<0.000000e+00> : vector<512x128xf32>
    %6 = tpu.matmul %4, %5, %cst {dimension_numbers = #tpu.dot_dimension_numbers<[1], [0], [0], [1], [0, 0, 1, 1], [], []>} : vector<512x128xbf16>, vector<128x128xbf16>, vector<512x128xf32> -> vector<512x128xf32>
    %7 = arith.addf %3, %6 : vector<512x128xf32>
    %c0_6 = arith.constant 0 : index
    %c0_7 = arith.constant 0 : index
    %8 = vector.load %arg7[%c0_6, %c0_7] : memref<512x128xf32, #tpu.memory_space<vmem>>, vector<512x128xf32>
    tpu.vector_store %arg7[%c0_6, %c0_7], %7 {strides = array<i32>} : memref<512x128xf32, #tpu.memory_space<vmem>>, vector<512x128xf32>,
    %c0_i32_8 = arith.constant 0 : i32
    %9 = arith.cmpi eq, %arg2, %c0_i32_8 : i32
    %10 = arith.extui %9 : i1 to i32
    %c0_i32_9 = arith.constant 0 : i32
    %11 = arith.cmpi ne, %10, %c0_i32_9 : i32
    scf.if %11 {
      %c0_10 = arith.constant 0 : index
      %c0_11 = arith.constant 0 : index
      %12 = vector.load %arg7[%c0_10, %c0_11] : memref<512x128xf32, #tpu.memory_space<vmem>>, vector<512x128xf32>
      %c0_12 = arith.constant 0 : index
      %c0_13 = arith.constant 0 : index
      %13 = vector.load %arg5[%c0_12, %c0_13] : memref<512x1xf32, #tpu.memory_space<vmem>>, vector<512x1xf32>
      %14 = vector.broadcast %13 : vector<512x1xf32> to vector<512x128xf32>
      %15 = arith.mulf %12, %14 : vector<512x128xf32>
      %cst_14 = arith.constant 0.000000e+00 : f32
      %16 = vector.broadcast %cst_14 : f32 to vector<512x128xf32>
      %17 = arith.maximumf %15, %16 : vector<512x128xf32>
      %c0_15 = arith.constant 0 : index
      %c0_16 = arith.constant 0 : index
      %18 = vector.load %arg6[%c0_15, %c0_16] : memref<512x128xf32, #tpu.memory_space<vmem>>, vector<512x128xf32>
      tpu.vector_store %arg6[%c0_15, %c0_16], %17 {strides = array<i32>} : memref<512x128xf32, #tpu.memory_space<vmem>>, vector<512x128xf32>,
    } else {
    }
    return
  }
  func.func @transform_0(%arg0: i32, %arg1: i32, %arg2: i32) -> (i32, i32) {
    %c0_i32 = arith.constant 0 : i32
    return %arg0, %arg2 : i32, i32
  }
  func.func @transform_1(%arg0: i32, %arg1: i32, %arg2: i32) -> (i32, i32) {
    %c0_i32 = arith.constant 0 : i32
    return %arg2, %arg1 : i32, i32
  }
  func.func @transform_2(%arg0: i32, %arg1: i32, %arg2: i32) -> (i32, i32) {
    %c0_i32 = arith.constant 0 : i32
    %c0_i32_0 = arith.constant 0 : i32
    return %arg0, %c0_i32 : i32, i32
  }
  func.func @transform_3(%arg0: i32, %arg1: i32, %arg2: i32) -> (i32, i32) {
    %c0_i32 = arith.constant 0 : i32
    return %arg0, %arg1 : i32, i32
  }
}

</mosaic_0001>

<llo_original>
// kernel: tpu_custom_call.1
$region0: #{tpu_custom_call.1}
  #allocation0 [shape = 'u32[]', space=smem, size = 0x4, offset = 0x4, fixed_abs, tag = 'smem constant byte address 0x4 - core index']
  #allocation1 [shape = 'u32[144,128]{1,0:T(1,128)}', space=vmem, size = 0x12000, scoped, tag = 'internal scratch']
  #allocation2 [shape = 'f32[512,128]{1,0:T(8,128)}', space=vmem, size = 0x40000, scoped, tag = 'scratch operand']
  %s0 = inlined_call_operand.vmem [shape: bf16[4096,128], index: 0, kind: input, shape index: {}]
  %s1 = inlined_call_operand.vmem [shape: bf16[128,128], index: 1, kind: input, shape index: {}]
  %s2 = inlined_call_operand.vmem [shape: f32[4096,1], index: 2, kind: input, shape index: {}]
  %s3 = inlined_call_operand.hbm [shape: f32[4096,128], index: 3, kind: output, shape index: {}]
  %s4 = sld [smem:[#allocation0]]
  $region53: #{tpu_custom_call.1} parent=0
    _
  %s6 = ssub.s32 1, %s4
  %s7 = scalar_select 0, %s6, %s4
  $region1: #{tpu_custom_call.1} parent=0
    #allocation3 [shape = 'u8[524288]{0}', space=vmem, size = 0x80000, scoped, tag = 'output window, operand 0']
    #allocation4 [shape = 's32[2]{0}', space=sflag, size = 0x8, scoped, tag = 'scoped memory for tpu_custom_call.1']
    %8 = vsyncpa [#allocation4], 0
    %s9 = scalar_lea.sflag [#allocation4], 1
    %10 = vsyncpa %s9, 0
    loop: start=0, step=1, limit=10
    $region2: #{tpu_custom_call.1} parent=1 // loop_pre_header
      _
    $region3: #{tpu_custom_call.1} parent=1 // loop_header
      %s12 = sphi 0, %s16
      %p13 = scmp.ge.s32.totalorder %s12, 10
      %s19 = sphi 0, %s38
      %s20 = sphi 0, %s34
      %s21 = sphi 0, %s30
      %s22 = sphi 0, %s19
      %s23 = sphi 0, %s20
      %s24 = sphi 0, %s21
      %s25 = sphi 0, %s22
      %s26 = sphi 0, %s23
      %s27 = sphi 0, %s24
      %s43 = sphi 0, %s45
      %s46 = sphi 0, %s43
      %s47 = sphi 0, %s46
      %s63 = sphi 0, %s47
      %s71 = sphi 0, %s73
      %s74 = sphi 0, %s71
      %s75 = sphi 0, %s74
      %s91 = sphi 0, %s75
      %s97 = sphi 0, %s99
      %s100 = sphi 0, %s97
      %s101 = sphi 0, %s100
      %s117 = sphi 0, %s101
      %s125 = sphi 0, %s127
      %s128 = sphi 0, %s125
      %s129 = sphi 0, %s128
      %s145 = sphi 0, %s129
    $region4: #{tpu_custom_call.1} parent=1 // loop_header_branch
      %15 = sbr.rel (%p13) target = $region8
    $region5: #{tpu_custom_call.1} parent=1 // loop_body
      %s17 = ssub.s32 %s12, 1
      %s18 = ssub.s32 %s12, 2
      %s28 = sadd.s32 1, %s21
      %p29 = scmp.ge.s32.totalorder %s28, 1
      %s30 = scalar_select %p29, 0, %s28
      %s31 = sadd.s32 1, %s20
      %s32 = scalar_select %p29, %s31, %s20
      %p33 = scmp.ge.s32.totalorder %s32, 1
      %s34 = scalar_select %p33, 0, %s32
      %s35 = sadd.s32 1, %s19
      %s36 = scalar_select %p33, %s35, %s19
      %p37 = scmp.ge.s32.totalorder %s36, 8
      %s38 = scalar_select %p37, 0, %s36
      %s39 = ssub.s32 %s19, %s38
      %s40 = ssub.s32 %s21, %s30
      %s41 = sor.u32 %s39, %s40
      %p42 = scmp.eq.s32.totalorder %s41, 0
      %s44 = sadd.s32 %s43, 1
      %s45 = scalar_select %p42, %s43, %s44
      %p48 = pneg %p42
      %p49 = scmp.eq.s32.totalorder %s12, 7
      %p50 = por %p48, %p49
      %p51 = scmp.ne.s32.totalorder %s43, %s46
      %p52 = scmp.eq.s32.totalorder %s12, 0
      %p53 = por %p51, %p52
      %p54 = scmp.ne.s32.totalorder %s43, %s46
      %p55 = scmp.eq.s32.totalorder %s17, 7
      %p56 = por %p54, %p55
      %p57 = scmp.ne.s32.totalorder %s46, %s47
      %p58 = scmp.eq.s32.totalorder %s17, 0
      %p59 = por %p57, %p58
      %p60 = scmp.ne.s32.totalorder %s46, %s47
      %p61 = scmp.eq.s32.totalorder %s18, 7
      %p62 = por %p60, %p61
      %p64 = scmp.ne.s32.totalorder %s47, %s63
      %p65 = scmp.eq.s32.totalorder %s18, 0
      %p66 = por %p64, %p65
      %s67 = ssub.s32 %s21, %s30
      %s68 = ssub.s32 %s20, %s34
      %s69 = sor.u32 %s67, %s68
      %p70 = scmp.eq.s32.totalorder %s69, 0
      %s72 = sadd.s32 %s71, 1
      %s73 = scalar_select %p70, %s71, %s72
      %p76 = pneg %p70
      %p77 = scmp.eq.s32.totalorder %s12, 7
      %p78 = por %p76, %p77
      %p79 = scmp.ne.s32.totalorder %s71, %s74
      %p80 = scmp.eq.s32.totalorder %s12, 0
      %p81 = por %p79, %p80
      %p82 = scmp.ne.s32.totalorder %s71, %s74
      %p83 = scmp.eq.s32.totalorder %s17, 7
      %p84 = por %p82, %p83
      %p85 = scmp.ne.s32.totalorder %s74, %s75
      %p86 = scmp.eq.s32.totalorder %s17, 0
      %p87 = por %p85, %p86
      %p88 = scmp.ne.s32.totalorder %s74, %s75
      %p89 = scmp.eq.s32.totalorder %s18, 7
      %p90 = por %p88, %p89
      %p92 = scmp.ne.s32.totalorder %s75, %s91
      %p93 = scmp.eq.s32.totalorder %s18, 0
      %p94 = por %p92, %p93
      %s95 = ssub.s32 %s19, %s38
      %p96 = scmp.eq.s32.totalorder %s95, 0
      %s98 = sadd.s32 %s97, 1
      %s99 = scalar_select %p96, %s97, %s98
      %p102 = pneg %p96
      %p103 = scmp.eq.s32.totalorder %s12, 7
      %p104 = por %p102, %p103
      %p105 = scmp.ne.s32.totalorder %s97, %s100
      %p106 = scmp.eq.s32.totalorder %s12, 0
      %p107 = por %p105, %p106
      %p108 = scmp.ne.s32.totalorder %s97, %s100
      %p109 = scmp.eq.s32.totalorder %s17, 7
      %p110 = por %p108, %p109
      %p111 = scmp.ne.s32.totalorder %s100, %s101
      %p112 = scmp.eq.s32.totalorder %s17, 0
      %p113 = por %p111, %p112
      %p114 = scmp.ne.s32.totalorder %s100, %s101
      %p115 = scmp.eq.s32.totalorder %s18, 7
      %p116 = por %p114, %p115
      %p118 = scmp.ne.s32.totalorder %s101, %s117
      %p119 = scmp.eq.s32.totalorder %s18, 0
      %p120 = por %p118, %p119
      %s121 = ssub.s32 %s19, %s38
      %s122 = ssub.s32 %s20, %s34
      %s123 = sor.u32 %s121, %s122
      %p124 = scmp.eq.s32.totalorder %s123, 0
      %s126 = sadd.s32 %s125, 1
      %s127 = scalar_select %p124, %s125, %s126
      %p130 = pneg %p124
      %p131 = scmp.eq.s32.totalorder %s12, 7
      %p132 = por %p130, %p131
      %p133 = scmp.ne.s32.totalorder %s125, %s128
      %p134 = scmp.eq.s32.totalorder %s12, 0
      %p135 = por %p133, %p134
      %p136 = scmp.ne.s32.totalorder %s125, %s128
      %p137 = scmp.eq.s32.totalorder %s17, 7
      %p138 = por %p136, %p137
      %p139 = scmp.ne.s32.totalorder %s128, %s129
      %p140 = scmp.eq.s32.totalorder %s17, 0
      %p141 = por %p139, %p140
      %p142 = scmp.ne.s32.totalorder %s128, %s129
      %p143 = scmp.eq.s32.totalorder %s18, 7
      %p144 = por %p142, %p143
      %p146 = scmp.ne.s32.totalorder %s129, %s145
      %p147 = scmp.eq.s32.totalorder %s18, 0
      %p148 = por %p146, %p147
      %p149 = scmp.le.s32.totalorder 1, %s12
      %p150 = scmp.lt.s32.totalorder %s12, 9
      %p151 = pnand %p149, %p150
      %p152 = pneg %p151
      // Predicated region
      $region9: #{tpu_custom_call.1} parent=5 // pred_check
        _
      $region10: #{tpu_custom_call.1} parent=5 // pred_check_branch
        %154 = sbr.rel (%p151) target = $region12
      $region11: #{tpu_custom_call.1} parent=5 // pred_region
        %s155 = ssub.s32 %s12, 1
        // Predicated region
        $region13: #{tpu_custom_call.1} parent=11 // pred_check
          %p156 = pneg %p87
        $region14: #{tpu_custom_call.1} parent=11 // pred_check_branch
          %158 = sbr.rel (%p156) target = $region16
        $region15: #{tpu_custom_call.1} parent=11 // pred_region
          %s159 = smul.u32 16, %s24
          %p160 = scmp.lt.s32.totalorder %s159, 15
          %s161 = scalar_select %p160, %s159, 15
          %p162 = scmp.lt.s32.totalorder %s23, 0
          %s163 = scalar_select %p162, %s23, 0
          %s164 = sadd.s32 %s163, %s161
          %s165 = smul.addr %s164, 4
          %s166 = scalar_lea.vmem %s1, %s165
          %s167 = smul.u32 16, %s24
        $region16: #{tpu_custom_call.1} parent=11 // pred_fallthru
          _
      $region12: #{tpu_custom_call.1} parent=5 // pred_fallthru
        _
      %p168 = scmp.lt.s32.totalorder %s12, 8
      // Predicated region
      $region17: #{tpu_custom_call.1} parent=5 // pred_check
        %p169 = pneg %p168
      $region18: #{tpu_custom_call.1} parent=5 // pred_check_branch
        %171 = sbr.rel (%p169) target = $region20
      $region19: #{tpu_custom_call.1} parent=5 // pred_region
        // Predicated region
        $region21: #{tpu_custom_call.1} parent=19 // pred_check
          %p172 = pneg %p53
        $region22: #{tpu_custom_call.1} parent=19 // pred_check_branch
          %174 = sbr.rel (%p172) target = $region24
        $region23: #{tpu_custom_call.1} parent=19 // pred_region
          %s175 = smul.u32 64, %s19
          %p176 = scmp.lt.s32.totalorder %s175, 511
          %s177 = scalar_select %p176, %s175, 511
          %p178 = scmp.lt.s32.totalorder %s21, 0
          %s179 = scalar_select %p178, %s21, 0
          %s180 = sadd.s32 %s179, %s177
          %s181 = smul.addr %s180, 4
          %s182 = scalar_lea.vmem %s0, %s181
          %s183 = smul.u32 64, %s19
        $region24: #{tpu_custom_call.1} parent=19 // pred_fallthru
          _
        // Predicated region
        $region25: #{tpu_custom_call.1} parent=19 // pred_check
          %p184 = pneg %p107
        $region26: #{tpu_custom_call.1} parent=19 // pred_check_branch
          %186 = sbr.rel (%p184) target = $region28
        $region27: #{tpu_custom_call.1} parent=19 // pred_region
          %s187 = smul.u32 64, %s19
          %p188 = scmp.lt.s32.totalorder %s187, 511
          %s189 = scalar_select %p188, %s187, 511
          %s190 = smul.addr %s189, 8
          %s191 = scalar_lea.vmem %s2, %s190
          %s192 = smul.u32 64, %s19
        $region28: #{tpu_custom_call.1} parent=19 // pred_fallthru
          _
      $region20: #{tpu_custom_call.1} parent=5 // pred_fallthru
        _
      %p193 = scmp.le.s32.totalorder 1, %s12
      %p194 = scmp.lt.s32.totalorder %s12, 9
      %p195 = pnand %p193, %p194
      %p196 = pneg %p195
      // Predicated region
      $region29: #{tpu_custom_call.1} parent=5 // pred_check
        _
      $region30: #{tpu_custom_call.1} parent=5 // pred_check_branch
        %198 = sbr.rel (%p195) target = $region32
      $region31: #{tpu_custom_call.1} parent=5 // pred_region
        %s199 = ssub.s32 %s12, 1
        %s200 = smul.u32 64, %s22
        %p201 = scmp.lt.s32.totalorder %s200, 511
        %s202 = scalar_select %p201, %s200, 511
        %p203 = scmp.lt.s32.totalorder %s24, 0
        %s204 = scalar_select %p203, %s24, 0
        %s205 = sadd.s32 %s204, %s202
        %s206 = smul.addr %s205, 4
        %s207 = scalar_lea.vmem %s0, %s206
        %p208 = pneg %p59
        %p209 = pneg %p56
        %s210 = smul.u32 16, %s24
        %p211 = scmp.lt.s32.totalorder %s210, 15
        %s212 = scalar_select %p211, %s210, 15
        %p213 = scmp.lt.s32.totalorder %s23, 0
        %s214 = scalar_select %p213, %s23, 0
        %s215 = sadd.s32 %s214, %s212
        %s216 = smul.addr %s215, 4
        %s217 = scalar_lea.vmem %s1, %s216
        %p218 = pneg %p87
        %p219 = pneg %p84
        %s220 = smul.u32 64, %s22
        %p221 = scmp.lt.s32.totalorder %s220, 511
        %s222 = scalar_select %p221, %s220, 511
        %s223 = smul.addr %s222, 8
        %s224 = scalar_lea.vmem %s2, %s223
        %p225 = pneg %p113
        %p226 = pneg %p110
        %p227 = pneg %p141
        %p228 = pneg %p138
        %s229 = sand.u32 %s128, 1
        %s230 = scalar_lea.sflag [#allocation4], %s229
        %s231 = sand.u32 %s128, 1
        %s232 = smul.addr %s231, 512
        %s233 = scalar_lea.vmem [#allocation3], %s232
        %s234 = smul.u32 64, %s22
        %p235 = scmp.lt.s32.totalorder %s234, 511
        %s236 = scalar_select %p235, %s234, 511
        %p237 = scmp.lt.s32.totalorder %s24, 0
        %s238 = scalar_select %p237, %s24, 0
        %s239 = sadd.s32 %s238, %s236
        %s240 = smul.addr %s239, 4
        %s241 = scalar_lea.vmem %s0, %s240
        %s242 = smul.u32 64, %s22
        %s243 = smul.u32 16, %s24
        %p244 = scmp.lt.s32.totalorder %s243, 15
        %s245 = scalar_select %p244, %s243, 15
        %p246 = scmp.lt.s32.totalorder %s23, 0
        %s247 = scalar_select %p246, %s23, 0
        %s248 = sadd.s32 %s247, %s245
        %s249 = smul.addr %s248, 4
        %s250 = scalar_lea.vmem %s1, %s249
        %s251 = smul.u32 16, %s24
        %s252 = smul.u32 64, %s22
        %p253 = scmp.lt.s32.totalorder %s252, 511
        %s254 = scalar_select %p253, %s252, 511
        %s255 = smul.addr %s254, 8
        %s256 = scalar_lea.vmem %s2, %s255
        %s257 = smul.u32 64, %s22
        %s258 = smul.u32 64, %s22
        %p260 = scmp.eq.s32.totalorder %s24, 0
        // Predicated region
        $region33: #{tpu_custom_call.1} parent=31 // pred_check
          %p261 = pneg %p260
        $region34: #{tpu_custom_call.1} parent=31 // pred_check_branch
          %263 = sbr.rel (%p261) target = $region36
        $region35: #{tpu_custom_call.1} parent=31 // pred_region
          %264 = vst [vmem:[#allocation2] sm:$0xff] 0.0
          %265 = vst [vmem:[#allocation2 + $0x8] sm:$0xff] 0.0
          %266 = vst [vmem:[#allocation2 + $0x10] sm:$0xff] 0.0
          %267 = vst [vmem:[#allocation2 + $0x18] sm:$0xff] 0.0
          %268 = vst [vmem:[#allocation2 + $0x20] sm:$0xff] 0.0
          %269 = vst [vmem:[#allocation2 + $0x28] sm:$0xff] 0.0
          %270 = vst [vmem:[#allocation2 + $0x30] sm:$0xff] 0.0
          %271 = vst [vmem:[#allocation2 + $0x38] sm:$0xff] 0.0
          %272 = vst [vmem:[#allocation2 + $0x40] sm:$0xff] 0.0
          %273 = vst [vmem:[#allocation2 + $0x48] sm:$0xff] 0.0
          %274 = vst [vmem:[#allocation2 + $0x50] sm:$0xff] 0.0
          %275 = vst [vmem:[#allocation2 + $0x58] sm:$0xff] 0.0
          %276 = vst [vmem:[#allocation2 + $0x60] sm:$0xff] 0.0
          %277 = vst [vmem:[#allocation2 + $0x68] sm:$0xff] 0.0
          %278 = vst [vmem:[#allocation2 + $0x70] sm:$0xff] 0.0
          %279 = vst [vmem:[#allocation2 + $0x78] sm:$0xff] 0.0
          %280 = vst [vmem:[#allocation2 + $0x80] sm:$0xff] 0.0
          %281 = vst [vmem:[#allocation2 + $0x88] sm:$0xff] 0.0
          %282 = vst [vmem:[#allocation2 + $0x90] sm:$0xff] 0.0
          %283 = vst [vmem:[#allocation2 + $0x98] sm:$0xff] 0.0
          %284 = vst [vmem:[#allocation2 + $0xa0] sm:$0xff] 0.0
          %285 = vst [vmem:[#allocation2 + $0xa8] sm:$0xff] 0.0
          %286 = vst [vmem:[#allocation2 + $0xb0] sm:$0xff] 0.0
          %287 = vst [vmem:[#allocation2 + $0xb8] sm:$0xff] 0.0
          %288 = vst [vmem:[#allocation2 + $0xc0] sm:$0xff] 0.0
          %289 = vst [vmem:[#allocation2 + $0xc8] sm:$0xff] 0.0
          %290 = vst [vmem:[#allocation2 + $0xd0] sm:$0xff] 0.0
          %291 = vst [vmem:[#allocation2 + $0xd8] sm:$0xff] 0.0
          %292 = vst [vmem:[#allocation2 + $0xe0] sm:$0xff] 0.0
          %293 = vst [vmem:[#allocation2 + $0xe8] sm:$0xff] 0.0
          %294 = vst [vmem:[#allocation2 + $0xf0] sm:$0xff] 0.0
          %295 = vst [vmem:[#allocation2 + $0xf8] sm:$0xff] 0.0
          %296 = vst [vmem:[#allocation2 + $0x100] sm:$0xff] 0.0
          %297 = vst [vmem:[#allocation2 + $0x108] sm:$0xff] 0.0
          %298 = vst [vmem:[#allocation2 + $0x110] sm:$0xff] 0.0
          %299 = vst [vmem:[#allocation2 + $0x118] sm:$0xff] 0.0
          %300 = vst [vmem:[#allocation2 + $0x120] sm:$0xff] 0.0
          %301 = vst [vmem:[#allocation2 + $0x128] sm:$0xff] 0.0
          %302 = vst [vmem:[#allocation2 + $0x130] sm:$0xff] 0.0
          %303 = vst [vmem:[#allocation2 + $0x138] sm:$0xff] 0.0
          %304 = vst [vmem:[#allocation2 + $0x140] sm:$0xff] 0.0
          %305 = vst [vmem:[#allocation2 + $0x148] sm:$0xff] 0.0
          %306 = vst [vmem:[#allocation2 + $0x150] sm:$0xff] 0.0
          %307 = vst [vmem:[#allocation2 + $0x158] sm:$0xff] 0.0
          %308 = vst [vmem:[#allocation2 + $0x160] sm:$0xff] 0.0
          %309 = vst [vmem:[#allocation2 + $0x168] sm:$0xff] 0.0
          %310 = vst [vmem:[#allocation2 + $0x170] sm:$0xff] 0.0
          %311 = vst [vmem:[#allocation2 + $0x178] sm:$0xff] 0.0
          %312 = vst [vmem:[#allocation2 + $0x180] sm:$0xff] 0.0
          %313 = vst [vmem:[#allocation2 + $0x188] sm:$0xff] 0.0
          %314 = vst [vmem:[#allocation2 + $0x190] sm:$0xff] 0.0
          %315 = vst [vmem:[#allocation2 + $0x198] sm:$0xff] 0.0
          %316 = vst [vmem:[#allocation2 + $0x1a0] sm:$0xff] 0.0
          %317 = vst [vmem:[#allocation2 + $0x1a8] sm:$0xff] 0.0
          %318 = vst [vmem:[#allocation2 + $0x1b0] sm:$0xff] 0.0
          %319 = vst [vmem:[#allocation2 + $0x1b8] sm:$0xff] 0.0
          %320 = vst [vmem:[#allocation2 + $0x1c0] sm:$0xff] 0.0
          %321 = vst [vmem:[#allocation2 + $0x1c8] sm:$0xff] 0.0
          %322 = vst [vmem:[#allocation2 + $0x1d0] sm:$0xff] 0.0
          %323 = vst [vmem:[#allocation2 + $0x1d8] sm:$0xff] 0.0
          %324 = vst [vmem:[#allocation2 + $0x1e0] sm:$0xff] 0.0
          %325 = vst [vmem:[#allocation2 + $0x1e8] sm:$0xff] 0.0
          %326 = vst [vmem:[#allocation2 + $0x1f0] sm:$0xff] 0.0
          %327 = vst [vmem:[#allocation2 + $0x1f8] sm:$0xff] 0.0
        $region36: #{tpu_custom_call.1} parent=31 // pred_fallthru
          _
        %v328 = vld [vmem:[#allocation2] sm:$0xff]
        %v329 = vld [vmem:[#allocation2 + $0x8] sm:$0xff]
        %v330 = vld [vmem:[#allocation2 + $0x10] sm:$0xff]
        %v331 = vld [vmem:[#allocation2 + $0x18] sm:$0xff]
        %v332 = vld [vmem:[#allocation2 + $0x20] sm:$0xff]
        %v333 = vld [vmem:[#allocation2 + $0x28] sm:$0xff]
        %v334 = vld [vmem:[#allocation2 + $0x30] sm:$0xff]
        %v335 = vld [vmem:[#allocation2 + $0x38] sm:$0xff]
        %v336 = vld [vmem:[#allocation2 + $0x40] sm:$0xff]
        %v337 = vld [vmem:[#allocation2 + $0x48] sm:$0xff]
        %v338 = vld [vmem:[#allocation2 + $0x50] sm:$0xff]
        %v339 = vld [vmem:[#allocation2 + $0x58] sm:$0xff]
        %v340 = vld [vmem:[#allocation2 + $0x60] sm:$0xff]
        %v341 = vld [vmem:[#allocation2 + $0x68] sm:$0xff]
        %v342 = vld [vmem:[#allocation2 + $0x70] sm:$0xff]
        %v343 = vld [vmem:[#allocation2 + $0x78] sm:$0xff]
        %v344 = vld [vmem:[#allocation2 + $0x80] sm:$0xff]
        %v345 = vld [vmem:[#allocation2 + $0x88] sm:$0xff]
        %v346 = vld [vmem:[#allocation2 + $0x90] sm:$0xff]
        %v347 = vld [vmem:[#allocation2 + $0x98] sm:$0xff]
        %v348 = vld [vmem:[#allocation2 + $0xa0] sm:$0xff]
        %v349 = vld [vmem:[#allocation2 + $0xa8] sm:$0xff]
        %v350 = vld [vmem:[#allocation2 + $0xb0] sm:$0xff]
        %v351 = vld [vmem:[#allocation2 + $0xb8] sm:$0xff]
        %v352 = vld [vmem:[#allocation2 + $0xc0] sm:$0xff]
        %v353 = vld [vmem:[#allocation2 + $0xc8] sm:$0xff]
        %v354 = vld [vmem:[#allocation2 + $0xd0] sm:$0xff]
        %v355 = vld [vmem:[#allocation2 + $0xd8] sm:$0xff]
        %v356 = vld [vmem:[#allocation2 + $0xe0] sm:$0xff]
        %v357 = vld [vmem:[#allocation2 + $0xe8] sm:$0xff]
        %v358 = vld [vmem:[#allocation2 + $0xf0] sm:$0xff]
        %v359 = vld [vmem:[#allocation2 + $0xf8] sm:$0xff]
        %v360 = vld [vmem:[#allocation2 + $0x100] sm:$0xff]
        %v361 = vld [vmem:[#allocation2 + $0x108] sm:$0xff]
        %v362 = vld [vmem:[#allocation2 + $0x110] sm:$0xff]
        %v363 = vld [vmem:[#allocation2 + $0x118] sm:$0xff]
        %v364 = vld [vmem:[#allocation2 + $0x120] sm:$0xff]
        %v365 = vld [vmem:[#allocation2 + $0x128] sm:$0xff]
        %v366 = vld [vmem:[#allocation2 + $0x130] sm:$0xff]
        %v367 = vld [vmem:[#allocation2 + $0x138] sm:$0xff]
        %v368 = vld [vmem:[#allocation2 + $0x140] sm:$0xff]
        %v369 = vld [vmem:[#allocation2 + $0x148] sm:$0xff]
        %v370 = vld [vmem:[#allocation2 + $0x150] sm:$0xff]
        %v371 = vld [vmem:[#allocation2 + $0x158] sm:$0xff]
        %v372 = vld [vmem:[#allocation2 + $0x160] sm:$0xff]
        %v373 = vld [vmem:[#allocation2 + $0x168] sm:$0xff]
        %v374 = vld [vmem:[#allocation2 + $0x170] sm:$0xff]
        %v375 = vld [vmem:[#allocation2 + $0x178] sm:$0xff]
        %v376 = vld [vmem:[#allocation2 + $0x180] sm:$0xff]
        %v377 = vld [vmem:[#allocation2 + $0x188] sm:$0xff]
        %v378 = vld [vmem:[#allocation2 + $0x190] sm:$0xff]
        %v379 = vld [vmem:[#allocation2 + $0x198] sm:$0xff]
        %v380 = vld [vmem:[#allocation2 + $0x1a0] sm:$0xff]
        %v381 = vld [vmem:[#allocation2 + $0x1a8] sm:$0xff]
        %v382 = vld [vmem:[#allocation2 + $0x1b0] sm:$0xff]
        %v383 = vld [vmem:[#allocation2 + $0x1b8] sm:$0xff]
        %v384 = vld [vmem:[#allocation2 + $0x1c0] sm:$0xff]
        %v385 = vld [vmem:[#allocation2 + $0x1c8] sm:$0xff]
        %v386 = vld [vmem:[#allocation2 + $0x1d0] sm:$0xff]
        %v387 = vld [vmem:[#allocation2 + $0x1d8] sm:$0xff]
        %v388 = vld [vmem:[#allocation2 + $0x1e0] sm:$0xff]
        %v389 = vld [vmem:[#allocation2 + $0x1e8] sm:$0xff]
        %v390 = vld [vmem:[#allocation2 + $0x1f0] sm:$0xff]
        %v391 = vld [vmem:[#allocation2 + $0x1f8] sm:$0xff]
        %v392 = vld [vmem:[%s241] sm:$0xf]
        %v393 = vld [vmem:[%s241 + $0x4] sm:$0xf]
        %v394 = vld [vmem:[%s241 + $0x8] sm:$0xf]
        %v395 = vld [vmem:[%s241 + $0xc] sm:$0xf]
        %v396 = vld [vmem:[%s241 + $0x10] sm:$0xf]
        %v397 = vld [vmem:[%s241 + $0x14] sm:$0xf]
        %v398 = vld [vmem:[%s241 + $0x18] sm:$0xf]
        %v399 = vld [vmem:[%s241 + $0x1c] sm:$0xf]
        %v400 = vld [vmem:[%s241 + $0x20] sm:$0xf]
        %v401 = vld [vmem:[%s241 + $0x24] sm:$0xf]
        %v402 = vld [vmem:[%s241 + $0x28] sm:$0xf]
        %v403 = vld [vmem:[%s241 + $0x2c] sm:$0xf]
        %v404 = vld [vmem:[%s241 + $0x30] sm:$0xf]
        %v405 = vld [vmem:[%s241 + $0x34] sm:$0xf]
        %v406 = vld [vmem:[%s241 + $0x38] sm:$0xf]
        %v407 = vld [vmem:[%s241 + $0x3c] sm:$0xf]
        %v408 = vld [vmem:[%s241 + $0x40] sm:$0xf]
        %v409 = vld [vmem:[%s241 + $0x44] sm:$0xf]
        %v410 = vld [vmem:[%s241 + $0x48] sm:$0xf]
        %v411 = vld [vmem:[%s241 + $0x4c] sm:$0xf]
        %v412 = vld [vmem:[%s241 + $0x50] sm:$0xf]
        %v413 = vld [vmem:[%s241 + $0x54] sm:$0xf]
        %v414 = vld [vmem:[%s241 + $0x58] sm:$0xf]
        %v415 = vld [vmem:[%s241 + $0x5c] sm:$0xf]
        %v416 = vld [vmem:[%s241 + $0x60] sm:$0xf]
        %v417 = vld [vmem:[%s241 + $0x64] sm:$0xf]
        %v418 = vld [vmem:[%s241 + $0x68] sm:$0xf]
        %v419 = vld [vmem:[%s241 + $0x6c] sm:$0xf]
        %v420 = vld [vmem:[%s241 + $0x70] sm:$0xf]
        %v421 = vld [vmem:[%s241 + $0x74] sm:$0xf]
        %v422 = vld [vmem:[%s241 + $0x78] sm:$0xf]
        %v423 = vld [vmem:[%s241 + $0x7c] sm:$0xf]
        %v424 = vld [vmem:[%s241 + $0x80] sm:$0xf]
        %v425 = vld [vmem:[%s241 + $0x84] sm:$0xf]
        %v426 = vld [vmem:[%s241 + $0x88] sm:$0xf]
        %v427 = vld [vmem:[%s241 + $0x8c] sm:$0xf]
        %v428 = vld [vmem:[%s241 + $0x90] sm:$0xf]
        %v429 = vld [vmem:[%s241 + $0x94] sm:$0xf]
        %v430 = vld [vmem:[%s241 + $0x98] sm:$0xf]
        %v431 = vld [vmem:[%s241 + $0x9c] sm:$0xf]
        %v432 = vld [vmem:[%s241 + $0xa0] sm:$0xf]
        %v433 = vld [vmem:[%s241 + $0xa4] sm:$0xf]
        %v434 = vld [vmem:[%s241 + $0xa8] sm:$0xf]
        %v435 = vld [vmem:[%s241 + $0xac] sm:$0xf]
        %v436 = vld [vmem:[%s241 + $0xb0] sm:$0xf]
        %v437 = vld [vmem:[%s241 + $0xb4] sm:$0xf]
        %v438 = vld [vmem:[%s241 + $0xb8] sm:$0xf]
        %v439 = vld [vmem:[%s241 + $0xbc] sm:$0xf]
        %v440 = vld [vmem:[%s241 + $0xc0] sm:$0xf]
        %v441 = vld [vmem:[%s241 + $0xc4] sm:$0xf]
        %v442 = vld [vmem:[%s241 + $0xc8] sm:$0xf]
        %v443 = vld [vmem:[%s241 + $0xcc] sm:$0xf]
        %v444 = vld [vmem:[%s241 + $0xd0] sm:$0xf]
        %v445 = vld [vmem:[%s241 + $0xd4] sm:$0xf]
        %v446 = vld [vmem:[%s241 + $0xd8] sm:$0xf]
        %v447 = vld [vmem:[%s241 + $0xdc] sm:$0xf]
        %v448 = vld [vmem:[%s241 + $0xe0] sm:$0xf]
        %v449 = vld [vmem:[%s241 + $0xe4] sm:$0xf]
        %v450 = vld [vmem:[%s241 + $0xe8] sm:$0xf]
        %v451 = vld [vmem:[%s241 + $0xec] sm:$0xf]
        %v452 = vld [vmem:[%s241 + $0xf0] sm:$0xf]
        %v453 = vld [vmem:[%s241 + $0xf4] sm:$0xf]
        %v454 = vld [vmem:[%s241 + $0xf8] sm:$0xf]
        %v455 = vld [vmem:[%s241 + $0xfc] sm:$0xf]
        %v456 = vld [vmem:[%s250] sm:$0xf]
        %v457 = vld [vmem:[%s250 + $0x4] sm:$0xf]
        %v458 = vld [vmem:[%s250 + $0x8] sm:$0xf]
        %v459 = vld [vmem:[%s250 + $0xc] sm:$0xf]
        %v460 = vld [vmem:[%s250 + $0x10] sm:$0xf]
        %v461 = vld [vmem:[%s250 + $0x14] sm:$0xf]
        %v462 = vld [vmem:[%s250 + $0x18] sm:$0xf]
        %v463 = vld [vmem:[%s250 + $0x1c] sm:$0xf]
        %v464 = vld [vmem:[%s250 + $0x20] sm:$0xf]
        %v465 = vld [vmem:[%s250 + $0x24] sm:$0xf]
        %v466 = vld [vmem:[%s250 + $0x28] sm:$0xf]
        %v467 = vld [vmem:[%s250 + $0x2c] sm:$0xf]
        %v468 = vld [vmem:[%s250 + $0x30] sm:$0xf]
        %v469 = vld [vmem:[%s250 + $0x34] sm:$0xf]
        %v470 = vld [vmem:[%s250 + $0x38] sm:$0xf]
        %v471 = vld [vmem:[%s250 + $0x3c] sm:$0xf]
        %v536 = vunpack.c.l.b16 %v392
        %v537 = vunpack.c.l.b16 %v393
        %v538 = vunpack.c.l.b16 %v394
        %v539 = vunpack.c.l.b16 %v395
        %v540 = vunpack.c.l.b16 %v396
        %v541 = vunpack.c.l.b16 %v397
        %v542 = vunpack.c.l.b16 %v398
        %v543 = vunpack.c.l.b16 %v399
        %v544 = vunpack.c.l.b16 %v400
        %v545 = vunpack.c.l.b16 %v401
        %v546 = vunpack.c.l.b16 %v402
        %v547 = vunpack.c.l.b16 %v403
        %v548 = vunpack.c.l.b16 %v404
        %v549 = vunpack.c.l.b16 %v405
        %v550 = vunpack.c.l.b16 %v406
        %v551 = vunpack.c.l.b16 %v407
        %v552 = vunpack.c.l.b16 %v408
        %v553 = vunpack.c.l.b16 %v409
        %v554 = vunpack.c.l.b16 %v410
        %v555 = vunpack.c.l.b16 %v411
        %v556 = vunpack.c.l.b16 %v412
        %v557 = vunpack.c.l.b16 %v413
        %v558 = vunpack.c.l.b16 %v414
        %v559 = vunpack.c.l.b16 %v415
        %v560 = vunpack.c.l.b16 %v416
        %v561 = vunpack.c.l.b16 %v417
        %v562 = vunpack.c.l.b16 %v418
        %v563 = vunpack.c.l.b16 %v419
        %v564 = vunpack.c.l.b16 %v420
        %v565 = vunpack.c.l.b16 %v421
        %v566 = vunpack.c.l.b16 %v422
        %v567 = vunpack.c.l.b16 %v423
        %v568 = vunpack.c.l.b16 %v424
        %v569 = vunpack.c.l.b16 %v425
        %v570 = vunpack.c.l.b16 %v426
        %v571 = vunpack.c.l.b16 %v427
        %v572 = vunpack.c.l.b16 %v428
        %v573 = vunpack.c.l.b16 %v429
        %v574 = vunpack.c.l.b16 %v430
        %v575 = vunpack.c.l.b16 %v431
        %v576 = vunpack.c.l.b16 %v432
        %v577 = vunpack.c.l.b16 %v433
        %v578 = vunpack.c.l.b16 %v434
        %v579 = vunpack.c.l.b16 %v435
        %v580 = vunpack.c.l.b16 %v436
        %v581 = vunpack.c.l.b16 %v437
        %v582 = vunpack.c.l.b16 %v438
        %v583 = vunpack.c.l.b16 %v439
        %v584 = vunpack.c.l.b16 %v440
        %v585 = vunpack.c.l.b16 %v441
        %v586 = vunpack.c.l.b16 %v442
        %v587 = vunpack.c.l.b16 %v443
        %v588 = vunpack.c.l.b16 %v444
        %v589 = vunpack.c.l.b16 %v445
        %v590 = vunpack.c.l.b16 %v446
        %v591 = vunpack.c.l.b16 %v447
        %v592 = vunpack.c.l.b16 %v448
        %v593 = vunpack.c.l.b16 %v449
        %v594 = vunpack.c.l.b16 %v450
        %v595 = vunpack.c.l.b16 %v451
        %v596 = vunpack.c.l.b16 %v452
        %v597 = vunpack.c.l.b16 %v453
        %v598 = vunpack.c.l.b16 %v454
        %v599 = vunpack.c.l.b16 %v455
        %v600 = vpack.c.b16 %v537, %v536
        %v601 = vpack.c.b16 %v539, %v538
        %v602 = vpack.c.b16 %v541, %v540
        %v603 = vpack.c.b16 %v543, %v542
        %v604 = vpack.c.b16 %v545, %v544
        %v605 = vpack.c.b16 %v547, %v546
        %v606 = vpack.c.b16 %v549, %v548
        %v607 = vpack.c.b16 %v551, %v550
        %v608 = vpack.c.b16 %v553, %v552
        %v609 = vpack.c.b16 %v555, %v554
        %v610 = vpack.c.b16 %v557, %v556
        %v611 = vpack.c.b16 %v559, %v558
        %v612 = vpack.c.b16 %v561, %v560
        %v613 = vpack.c.b16 %v563, %v562
        %v614 = vpack.c.b16 %v565, %v564
        %v615 = vpack.c.b16 %v567, %v566
        %v616 = vpack.c.b16 %v569, %v568
        %v617 = vpack.c.b16 %v571, %v570
        %v618 = vpack.c.b16 %v573, %v572
        %v619 = vpack.c.b16 %v575, %v574
        %v620 = vpack.c.b16 %v577, %v576
        %v621 = vpack.c.b16 %v579, %v578
        %v622 = vpack.c.b16 %v581, %v580
        %v623 = vpack.c.b16 %v583, %v582
        %v624 = vpack.c.b16 %v585, %v584
        %v625 = vpack.c.b16 %v587, %v586
        %v626 = vpack.c.b16 %v589, %v588
        %v627 = vpack.c.b16 %v591, %v590
        %v628 = vpack.c.b16 %v593, %v592
        %v629 = vpack.c.b16 %v595, %v594
        %v630 = vpack.c.b16 %v597, %v596
        %v631 = vpack.c.b16 %v599, %v598
        %v680 = vunpack.c.l.b16 %v456
        %v681 = vunpack.c.l.b16 %v457
        %v682 = vunpack.c.l.b16 %v458
        %v683 = vunpack.c.l.b16 %v459
        %v684 = vunpack.c.l.b16 %v460
        %v685 = vunpack.c.l.b16 %v461
        %v686 = vunpack.c.l.b16 %v462
        %v687 = vunpack.c.l.b16 %v463
        %v688 = vunpack.c.l.b16 %v464
        %v689 = vunpack.c.l.b16 %v465
        %v690 = vunpack.c.l.b16 %v466
        %v691 = vunpack.c.l.b16 %v467
        %v692 = vunpack.c.l.b16 %v468
        %v693 = vunpack.c.l.b16 %v469
        %v694 = vunpack.c.l.b16 %v470
        %v695 = vunpack.c.l.b16 %v471
        %v696 = vpack.c.b16 %v681, %v680
        %v697 = vpack.c.b16 %v683, %v682
        %v698 = vpack.c.b16 %v685, %v684
        %v699 = vpack.c.b16 %v687, %v686
        %v700 = vpack.c.b16 %v689, %v688
        %v701 = vpack.c.b16 %v691, %v690
        %v702 = vpack.c.b16 %v693, %v692
        %v703 = vpack.c.b16 %v695, %v694
        %712 = vmatprep.subr.bf16.mxu0 0
        %713 = vmatpush1.bf16.msra.mxu0 %v696
        %714 = vmatprep.subr.bf16.mxu0 0
        %715 = vmatpush1.bf16.msra.mxu0 %v697
        %716 = vmatprep.subr.bf16.mxu0 0
        %717 = vmatpush1.bf16.msra.mxu0 %v698
        %718 = vmatprep.subr.bf16.mxu0 0
        %719 = vmatpush1.bf16.msra.mxu0 %v699
        %720 = vmatprep.subr.bf16.mxu0 0
        %721 = vmatpush1.bf16.msra.mxu0 %v700
        %722 = vmatprep.subr.bf16.mxu0 0
        %723 = vmatpush1.bf16.msra.mxu0 %v701
        %724 = vmatprep.subr.bf16.mxu0 0
        %725 = vmatpush1.bf16.msra.mxu0 %v702
        %726 = vmatprep.subr.bf16.mxu0 0
        %727 = vmatpush1.bf16.msra.mxu0 %v703
        %728 = vmatprep.subr.bf16.mxu0 0
        %729 = vmatpush1.bf16.msra.mxu0 0
        %730 = vmatprep.subr.bf16.mxu0 0
        %731 = vmatpush1.bf16.msra.mxu0 0
        %732 = vmatprep.subr.bf16.mxu0 0
        %733 = vmatpush1.bf16.msra.mxu0 0
        %734 = vmatprep.subr.bf16.mxu0 0
        %735 = vmatpush1.bf16.msra.mxu0 0
        %736 = vmatprep.subr.bf16.mxu0 0
        %737 = vmatpush1.bf16.msra.mxu0 0
        %738 = vmatprep.subr.bf16.mxu0 0
        %739 = vmatpush1.bf16.msra.mxu0 0
        %740 = vmatprep.subr.bf16.mxu0 0
        %741 = vmatpush1.bf16.msra.mxu0 0
        %742 = vmatprep.subr.bf16.mxu0 0
        %743 = vmatpush1.bf16.msra.mxu0 0
        %744 = vmatprep.mubr.bf16.mxu0 0
        %745 = vmatmul.mubr.bf16.gmra.mrb[0].mxu0 %v600
        %v746 = vpop.f32.mrb[0].mxu0
        %v747 = vadd.f32 0.0, %v746
        %v748 = vpop.f32.mrb[0].mxu0
        %v749 = vpop.f32.mrb[0].mxu0
        %v750 = vadd.f32 0.0, %v749
        %v751 = vpop.f32.mrb[0].mxu0
        %752 = vmatprep.mubr.bf16.mxu0 0
        %753 = vmatmul.mubr.bf16.gmra.mrb[0].mxu0 %v601
        %v754 = vpop.f32.mrb[0].mxu0
        %v755 = vadd.f32 0.0, %v754
        %v756 = vpop.f32.mrb[0].mxu0
        %v757 = vpop.f32.mrb[0].mxu0
        %v758 = vadd.f32 0.0, %v757
        %v759 = vpop.f32.mrb[0].mxu0
        %760 = vmatprep.mubr.bf16.mxu0 0
        %761 = vmatmul.mubr.bf16.gmra.mrb[0].mxu0 %v602
        %v762 = vpop.f32.mrb[0].mxu0
        %v763 = vadd.f32 0.0, %v762
        %v764 = vpop.f32.mrb[0].mxu0
        %v765 = vpop.f32.mrb[0].mxu0
        %v766 = vadd.f32 0.0, %v765
        %v767 = vpop.f32.mrb[0].mxu0
        %768 = vmatprep.mubr.bf16.mxu0 0
        %769 = vmatmul.mubr.bf16.gmra.mrb[0].mxu0 %v603
        %v770 = vpop.f32.mrb[0].mxu0
        %v771 = vadd.f32 0.0, %v770
        %v772 = vpop.f32.mrb[0].mxu0
        %v773 = vpop.f32.mrb[0].mxu0
        %v774 = vadd.f32 0.0, %v773
        %v775 = vpop.f32.mrb[0].mxu0
        %776 = vmatprep.mubr.bf16.mxu0 0
        %777 = vmatmul.mubr.bf16.gmra.mrb[0].mxu0 %v604
        %v778 = vpop.f32.mrb[0].mxu0
        %v779 = vadd.f32 0.0, %v778
        %v780 = vpop.f32.mrb[0].mxu0
        %v781 = vpop.f32.mrb[0].mxu0
        %v782 = vadd.f32 0.0, %v781
        %v783 = vpop.f32.mrb[0].mxu0
        %784 = vmatprep.mubr.bf16.mxu0 0
        %785 = vmatmul.mubr.bf16.gmra.mrb[0].mxu0 %v605
        %v786 = vpop.f32.mrb[0].mxu0
        %v787 = vadd.f32 0.0, %v786
        %v788 = vpop.f32.mrb[0].mxu0
        %v789 = vpop.f32.mrb[0].mxu0
        %v790 = vadd.f32 0.0, %v789
        %v791 = vpop.f32.mrb[0].mxu0
        %792 = vmatprep.mubr.bf16.mxu0 0
        %793 = vmatmul.mubr.bf16.gmra.mrb[0].mxu0 %v606
        %v794 = vpop.f32.mrb[0].mxu0
        %v795 = vadd.f32 0.0, %v794
        %v796 = vpop.f32.mrb[0].mxu0
        %v797 = vpop.f32.mrb[0].mxu0
        %v798 = vadd.f32 0.0, %v797
        %v799 = vpop.f32.mrb[0].mxu0
        %800 = vmatprep.mubr.bf16.mxu0 0
        %801 = vmatmul.mubr.bf16.gmra.mrb[0].mxu0 %v607
        %v802 = vpop.f32.mrb[0].mxu0
        %v803 = vadd.f32 0.0, %v802
        %v804 = vpop.f32.mrb[0].mxu0
        %v805 = vpop.f32.mrb[0].mxu0
        %v806 = vadd.f32 0.0, %v805
        %v807 = vpop.f32.mrb[0].mxu0
        %808 = vmatprep.mubr.bf16.mxu0 0
        %809 = vmatmul.mubr.bf16.gmra.mrb[0].mxu0 %v608
        %v810 = vpop.f32.mrb[0].mxu0
        %v811 = vadd.f32 0.0, %v810
        %v812 = vpop.f32.mrb[0].mxu0
        %v813 = vpop.f32.mrb[0].mxu0
        %v814 = vadd.f32 0.0, %v813
        %v815 = vpop.f32.mrb[0].mxu0
        %816 = vmatprep.mubr.bf16.mxu0 0
        %817 = vmatmul.mubr.bf16.gmra.mrb[0].mxu0 %v609
        %v818 = vpop.f32.mrb[0].mxu0
        %v819 = vadd.f32 0.0, %v818
        %v820 = vpop.f32.mrb[0].mxu0
        %v821 = vpop.f32.mrb[0].mxu0
        %v822 = vadd.f32 0.0, %v821
        %v823 = vpop.f32.mrb[0].mxu0
        %824 = vmatprep.mubr.bf16.mxu0 0
        %825 = vmatmul.mubr.bf16.gmra.mrb[0].mxu0 %v610
        %v826 = vpop.f32.mrb[0].mxu0
        %v827 = vadd.f32 0.0, %v826
        %v828 = vpop.f32.mrb[0].mxu0
        %v829 = vpop.f32.mrb[0].mxu0
        %v830 = vadd.f32 0.0, %v829
        %v831 = vpop.f32.mrb[0].mxu0
        %832 = vmatprep.mubr.bf16.mxu0 0
        %833 = vmatmul.mubr.bf16.gmra.mrb[0].mxu0 %v611
        %v834 = vpop.f32.mrb[0].mxu0
        %v835 = vadd.f32 0.0, %v834
        %v836 = vpop.f32.mrb[0].mxu0
        %v837 = vpop.f32.mrb[0].mxu0
        %v838 = vadd.f32 0.0, %v837
        %v839 = vpop.f32.mrb[0].mxu0
        %840 = vmatprep.mubr.bf16.mxu0 0
        %841 = vmatmul.mubr.bf16.gmra.mrb[0].mxu0 %v612
        %v842 = vpop.f32.mrb[0].mxu0
        %v843 = vadd.f32 0.0, %v842
        %v844 = vpop.f32.mrb[0].mxu0
        %v845 = vpop.f32.mrb[0].mxu0
        %v846 = vadd.f32 0.0, %v845
        %v847 = vpop.f32.mrb[0].mxu0
        %848 = vmatprep.mubr.bf16.mxu0 0
        %849 = vmatmul.mubr.bf16.gmra.mrb[0].mxu0 %v613
        %v850 = vpop.f32.mrb[0].mxu0
        %v851 = vadd.f32 0.0, %v850
        %v852 = vpop.f32.mrb[0].mxu0
        %v853 = vpop.f32.mrb[0].mxu0
        %v854 = vadd.f32 0.0, %v853
        %v855 = vpop.f32.mrb[0].mxu0
        %856 = vmatprep.mubr.bf16.mxu0 0
        %857 = vmatmul.mubr.bf16.gmra.mrb[0].mxu0 %v614
        %v858 = vpop.f32.mrb[0].mxu0
        %v859 = vadd.f32 0.0, %v858
        %v860 = vpop.f32.mrb[0].mxu0
        %v861 = vpop.f32.mrb[0].mxu0
        %v862 = vadd.f32 0.0, %v861
        %v863 = vpop.f32.mrb[0].mxu0
        %864 = vmatprep.mubr.bf16.mxu0 0
        %865 = vmatmul.mubr.bf16.gmra.mrb[0].mxu0 %v615
        %v866 = vpop.f32.mrb[0].mxu0
        %v867 = vadd.f32 0.0, %v866
        %v868 = vpop.f32.mrb[0].mxu0
        %v869 = vpop.f32.mrb[0].mxu0
        %v870 = vadd.f32 0.0, %v869
        %v871 = vpop.f32.mrb[0].mxu0
        %872 = vmatprep.mubr.bf16.mxu0 0
        %873 = vmatmul.mubr.bf16.gmra.mrb[0].mxu0 %v616
        %v874 = vpop.f32.mrb[0].mxu0
        %v875 = vadd.f32 0.0, %v874
        %v876 = vpop.f32.mrb[0].mxu0
        %v877 = vpop.f32.mrb[0].mxu0
        %v878 = vadd.f32 0.0, %v877
        %v879 = vpop.f32.mrb[0].mxu0
        %880 = vmatprep.mubr.bf16.mxu0 0
        %881 = vmatmul.mubr.bf16.gmra.mrb[0].mxu0 %v617
        %v882 = vpop.f32.mrb[0].mxu0
        %v883 = vadd.f32 0.0, %v882
        %v884 = vpop.f32.mrb[0].mxu0
        %v885 = vpop.f32.mrb[0].mxu0
        %v886 = vadd.f32 0.0, %v885
        %v887 = vpop.f32.mrb[0].mxu0
        %888 = vmatprep.mubr.bf16.mxu0 0
        %889 = vmatmul.mubr.bf16.gmra.mrb[0].mxu0 %v618
        %v890 = vpop.f32.mrb[0].mxu0
        %v891 = vadd.f32 0.0, %v890
        %v892 = vpop.f32.mrb[0].mxu0
        %v893 = vpop.f32.mrb[0].mxu0
        %v894 = vadd.f32 0.0, %v893
        %v895 = vpop.f32.mrb[0].mxu0
        %896 = vmatprep.mubr.bf16.mxu0 0
        %897 = vmatmul.mubr.bf16.gmra.mrb[0].mxu0 %v619
        %v898 = vpop.f32.mrb[0].mxu0
        %v899 = vadd.f32 0.0, %v898
        %v900 = vpop.f32.mrb[0].mxu0
        %v901 = vpop.f32.mrb[0].mxu0
        %v902 = vadd.f32 0.0, %v901
        %v903 = vpop.f32.mrb[0].mxu0
        %904 = vmatprep.mubr.bf16.mxu0 0
        %905 = vmatmul.mubr.bf16.gmra.mrb[0].mxu0 %v620
        %v906 = vpop.f32.mrb[0].mxu0
        %v907 = vadd.f32 0.0, %v906
        %v908 = vpop.f32.mrb[0].mxu0
        %v909 = vpop.f32.mrb[0].mxu0
        %v910 = vadd.f32 0.0, %v909
        %v911 = vpop.f32.mrb[0].mxu0
        %912 = vmatprep.mubr.bf16.mxu0 0
        %913 = vmatmul.mubr.bf16.gmra.mrb[0].mxu0 %v621
        %v914 = vpop.f32.mrb[0].mxu0
        %v915 = vadd.f32 0.0, %v914
        %v916 = vpop.f32.mrb[0].mxu0
        %v917 = vpop.f32.mrb[0].mxu0
        %v918 = vadd.f32 0.0, %v917
        %v919 = vpop.f32.mrb[0].mxu0
        %920 = vmatprep.mubr.bf16.mxu0 0
        %921 = vmatmul.mubr.bf16.gmra.mrb[0].mxu0 %v622
        %v922 = vpop.f32.mrb[0].mxu0
        %v923 = vadd.f32 0.0, %v922
        %v924 = vpop.f32.mrb[0].mxu0
        %v925 = vpop.f32.mrb[0].mxu0
        %v926 = vadd.f32 0.0, %v925
        %v927 = vpop.f32.mrb[0].mxu0
        %928 = vmatprep.mubr.bf16.mxu0 0
        %929 = vmatmul.mubr.bf16.gmra.mrb[0].mxu0 %v623
        %v930 = vpop.f32.mrb[0].mxu0
        %v931 = vadd.f32 0.0, %v930
        %v932 = vpop.f32.mrb[0].mxu0
        %v933 = vpop.f32.mrb[0].mxu0
        %v934 = vadd.f32 0.0, %v933
        %v935 = vpop.f32.mrb[0].mxu0
        %936 = vmatprep.mubr.bf16.mxu0 0
        %937 = vmatmul.mubr.bf16.gmra.mrb[0].mxu0 %v624
        %v938 = vpop.f32.mrb[0].mxu0
        %v939 = vadd.f32 0.0, %v938
        %v940 = vpop.f32.mrb[0].mxu0
        %v941 = vpop.f32.mrb[0].mxu0
        %v942 = vadd.f32 0.0, %v941
        %v943 = vpop.f32.mrb[0].mxu0
        %944 = vmatprep.mubr.bf16.mxu0 0
        %945 = vmatmul.mubr.bf16.gmra.mrb[0].mxu0 %v625
        %v946 = vpop.f32.mrb[0].mxu0
        %v947 = vadd.f32 0.0, %v946
        %v948 = vpop.f32.mrb[0].mxu0
        %v949 = vpop.f32.mrb[0].mxu0
        %v950 = vadd.f32 0.0, %v949
        %v951 = vpop.f32.mrb[0].mxu0
        %952 = vmatprep.mubr.bf16.mxu0 0
        %953 = vmatmul.mubr.bf16.gmra.mrb[0].mxu0 %v626
        %v954 = vpop.f32.mrb[0].mxu0
        %v955 = vadd.f32 0.0, %v954
        %v956 = vpop.f32.mrb[0].mxu0
        %v957 = vpop.f32.mrb[0].mxu0
        %v958 = vadd.f32 0.0, %v957
        %v959 = vpop.f32.mrb[0].mxu0
        %960 = vmatprep.mubr.bf16.mxu0 0
        %961 = vmatmul.mubr.bf16.gmra.mrb[0].mxu0 %v627
        %v962 = vpop.f32.mrb[0].mxu0
        %v963 = vadd.f32 0.0, %v962
        %v964 = vpop.f32.mrb[0].mxu0
        %v965 = vpop.f32.mrb[0].mxu0
        %v966 = vadd.f32 0.0, %v965
        %v967 = vpop.f32.mrb[0].mxu0
        %968 = vmatprep.mubr.bf16.mxu0 0
        %969 = vmatmul.mubr.bf16.gmra.mrb[0].mxu0 %v628
        %v970 = vpop.f32.mrb[0].mxu0
        %v971 = vadd.f32 0.0, %v970
        %v972 = vpop.f32.mrb[0].mxu0
        %v973 = vpop.f32.mrb[0].mxu0
        %v974 = vadd.f32 0.0, %v973
        %v975 = vpop.f32.mrb[0].mxu0
        %976 = vmatprep.mubr.bf16.mxu0 0
        %977 = vmatmul.mubr.bf16.gmra.mrb[0].mxu0 %v629
        %v978 = vpop.f32.mrb[0].mxu0
        %v979 = vadd.f32 0.0, %v978
        %v980 = vpop.f32.mrb[0].mxu0
        %v981 = vpop.f32.mrb[0].mxu0
        %v982 = vadd.f32 0.0, %v981
        %v983 = vpop.f32.mrb[0].mxu0
        %984 = vmatprep.mubr.bf16.mxu0 0
        %985 = vmatmul.mubr.bf16.gmra.mrb[0].mxu0 %v630
        %v986 = vpop.f32.mrb[0].mxu0
        %v987 = vadd.f32 0.0, %v986
        %v988 = vpop.f32.mrb[0].mxu0
        %v989 = vpop.f32.mrb[0].mxu0
        %v990 = vadd.f32 0.0, %v989
        %v991 = vpop.f32.mrb[0].mxu0
        %992 = vmatprep.mubr.bf16.mxu0 0
        %993 = vmatmul.mubr.bf16.gmra.mrb[0].mxu0 %v631
        %v994 = vpop.f32.mrb[0].mxu0
        %v995 = vadd.f32 0.0, %v994
        %v996 = vpop.f32.mrb[0].mxu0
        %v997 = vpop.f32.mrb[0].mxu0
        %v998 = vadd.f32 0.0, %v997
        %v999 = vpop.f32.mrb[0].mxu0
        %1000 = vdwg.mxu0
        %v1001 = vadd.f32 %v328, %v747
        %v1002 = vadd.f32 %v329, %v750
        %v1003 = vadd.f32 %v330, %v755
        %v1004 = vadd.f32 %v331, %v758
        %v1005 = vadd.f32 %v332, %v763
        %v1006 = vadd.f32 %v333, %v766
        %v1007 = vadd.f32 %v334, %v771
        %v1008 = vadd.f32 %v335, %v774
        %v1009 = vadd.f32 %v336, %v779
        %v1010 = vadd.f32 %v337, %v782
        %v1011 = vadd.f32 %v338, %v787
        %v1012 = vadd.f32 %v339, %v790
        %v1013 = vadd.f32 %v340, %v795
        %v1014 = vadd.f32 %v341, %v798
        %v1015 = vadd.f32 %v342, %v803
        %v1016 = vadd.f32 %v343, %v806
        %v1017 = vadd.f32 %v344, %v811
        %v1018 = vadd.f32 %v345, %v814
        %v1019 = vadd.f32 %v346, %v819
        %v1020 = vadd.f32 %v347, %v822
        %v1021 = vadd.f32 %v348, %v827
        %v1022 = vadd.f32 %v349, %v830
        %v1023 = vadd.f32 %v350, %v835
        %v1024 = vadd.f32 %v351, %v838
        %v1025 = vadd.f32 %v352, %v843
        %v1026 = vadd.f32 %v353, %v846
        %v1027 = vadd.f32 %v354, %v851
        %v1028 = vadd.f32 %v355, %v854
        %v1029 = vadd.f32 %v356, %v859
        %v1030 = vadd.f32 %v357, %v862
        %v1031 = vadd.f32 %v358, %v867
        %v1032 = vadd.f32 %v359, %v870
        %v1033 = vadd.f32 %v360, %v875
        %v1034 = vadd.f32 %v361, %v878
        %v1035 = vadd.f32 %v362, %v883
        %v1036 = vadd.f32 %v363, %v886
        %v1037 = vadd.f32 %v364, %v891
        %v1038 = vadd.f32 %v365, %v894
        %v1039 = vadd.f32 %v366, %v899
        %v1040 = vadd.f32 %v367, %v902
        %v1041 = vadd.f32 %v368, %v907
        %v1042 = vadd.f32 %v369, %v910
        %v1043 = vadd.f32 %v370, %v915
        %v1044 = vadd.f32 %v371, %v918
        %v1045 = vadd.f32 %v372, %v923
        %v1046 = vadd.f32 %v373, %v926
        %v1047 = vadd.f32 %v374, %v931
        %v1048 = vadd.f32 %v375, %v934
        %v1049 = vadd.f32 %v376, %v939
        %v1050 = vadd.f32 %v377, %v942
        %v1051 = vadd.f32 %v378, %v947
        %v1052 = vadd.f32 %v379, %v950
        %v1053 = vadd.f32 %v380, %v955
        %v1054 = vadd.f32 %v381, %v958
        %v1055 = vadd.f32 %v382, %v963
        %v1056 = vadd.f32 %v383, %v966
        %v1057 = vadd.f32 %v384, %v971
        %v1058 = vadd.f32 %v385, %v974
        %v1059 = vadd.f32 %v386, %v979
        %v1060 = vadd.f32 %v387, %v982
        %v1061 = vadd.f32 %v388, %v987
        %v1062 = vadd.f32 %v389, %v990
        %v1063 = vadd.f32 %v390, %v995
        %v1064 = vadd.f32 %v391, %v998
        %1065 = vst [vmem:[#allocation2] sm:$0xff] %v1001
        %1066 = vst [vmem:[#allocation2 + $0x8] sm:$0xff] %v1002
        %1067 = vst [vmem:[#allocation2 + $0x10] sm:$0xff] %v1003
        %1068 = vst [vmem:[#allocation2 + $0x18] sm:$0xff] %v1004
        %1069 = vst [vmem:[#allocation2 + $0x20] sm:$0xff] %v1005
        %1070 = vst [vmem:[#allocation2 + $0x28] sm:$0xff] %v1006
        %1071 = vst [vmem:[#allocation2 + $0x30] sm:$0xff] %v1007
        %1072 = vst [vmem:[#allocation2 + $0x38] sm:$0xff] %v1008
        %1073 = vst [vmem:[#allocation2 + $0x40] sm:$0xff] %v1009
        %1074 = vst [vmem:[#allocation2 + $0x48] sm:$0xff] %v1010
        %1075 = vst [vmem:[#allocation2 + $0x50] sm:$0xff] %v1011
        %1076 = vst [vmem:[#allocation2 + $0x58] sm:$0xff] %v1012
        %1077 = vst [vmem:[#allocation2 + $0x60] sm:$0xff] %v1013
        %1078 = vst [vmem:[#allocation2 + $0x68] sm:$0xff] %v1014
        %1079 = vst [vmem:[#allocation2 + $0x70] sm:$0xff] %v1015
        %1080 = vst [vmem:[#allocation2 + $0x78] sm:$0xff] %v1016
        %1081 = vst [vmem:[#allocation2 + $0x80] sm:$0xff] %v1017
        %1082 = vst [vmem:[#allocation2 + $0x88] sm:$0xff] %v1018
        %1083 = vst [vmem:[#allocation2 + $0x90] sm:$0xff] %v1019
        %1084 = vst [vmem:[#allocation2 + $0x98] sm:$0xff] %v1020
        %1085 = vst [vmem:[#allocation2 + $0xa0] sm:$0xff] %v1021
        %1086 = vst [vmem:[#allocation2 + $0xa8] sm:$0xff] %v1022
        %1087 = vst [vmem:[#allocation2 + $0xb0] sm:$0xff] %v1023
        %1088 = vst [vmem:[#allocation2 + $0xb8] sm:$0xff] %v1024
        %1089 = vst [vmem:[#allocation2 + $0xc0] sm:$0xff] %v1025
        %1090 = vst [vmem:[#allocation2 + $0xc8] sm:$0xff] %v1026
        %1091 = vst [vmem:[#allocation2 + $0xd0] sm:$0xff] %v1027
        %1092 = vst [vmem:[#allocation2 + $0xd8] sm:$0xff] %v1028
        %1093 = vst [vmem:[#allocation2 + $0xe0] sm:$0xff] %v1029
        %1094 = vst [vmem:[#allocation2 + $0xe8] sm:$0xff] %v1030
        %1095 = vst [vmem:[#allocation2 + $0xf0] sm:$0xff] %v1031
        %1096 = vst [vmem:[#allocation2 + $0xf8] sm:$0xff] %v1032
        %1097 = vst [vmem:[#allocation2 + $0x100] sm:$0xff] %v1033
        %1098 = vst [vmem:[#allocation2 + $0x108] sm:$0xff] %v1034
        %1099 = vst [vmem:[#allocation2 + $0x110] sm:$0xff] %v1035
        %1100 = vst [vmem:[#allocation2 + $0x118] sm:$0xff] %v1036
        %1101 = vst [vmem:[#allocation2 + $0x120] sm:$0xff] %v1037
        %1102 = vst [vmem:[#allocation2 + $0x128] sm:$0xff] %v1038
        %1103 = vst [vmem:[#allocation2 + $0x130] sm:$0xff] %v1039
        %1104 = vst [vmem:[#allocation2 + $0x138] sm:$0xff] %v1040
        %1105 = vst [vmem:[#allocation2 + $0x140] sm:$0xff] %v1041
        %1106 = vst [vmem:[#allocation2 + $0x148] sm:$0xff] %v1042
        %1107 = vst [vmem:[#allocation2 + $0x150] sm:$0xff] %v1043
        %1108 = vst [vmem:[#allocation2 + $0x158] sm:$0xff] %v1044
        %1109 = vst [vmem:[#allocation2 + $0x160] sm:$0xff] %v1045
        %1110 = vst [vmem:[#allocation2 + $0x168] sm:$0xff] %v1046
        %1111 = vst [vmem:[#allocation2 + $0x170] sm:$0xff] %v1047
        %1112 = vst [vmem:[#allocation2 + $0x178] sm:$0xff] %v1048
        %1113 = vst [vmem:[#allocation2 + $0x180] sm:$0xff] %v1049
        %1114 = vst [vmem:[#allocation2 + $0x188] sm:$0xff] %v1050
        %1115 = vst [vmem:[#allocation2 + $0x190] sm:$0xff] %v1051
        %1116 = vst [vmem:[#allocation2 + $0x198] sm:$0xff] %v1052
        %1117 = vst [vmem:[#allocation2 + $0x1a0] sm:$0xff] %v1053
        %1118 = vst [vmem:[#allocation2 + $0x1a8] sm:$0xff] %v1054
        %1119 = vst [vmem:[#allocation2 + $0x1b0] sm:$0xff] %v1055
        %1120 = vst [vmem:[#allocation2 + $0x1b8] sm:$0xff] %v1056
        %1121 = vst [vmem:[#allocation2 + $0x1c0] sm:$0xff] %v1057
        %1122 = vst [vmem:[#allocation2 + $0x1c8] sm:$0xff] %v1058
        %1123 = vst [vmem:[#allocation2 + $0x1d0] sm:$0xff] %v1059
        %1124 = vst [vmem:[#allocation2 + $0x1d8] sm:$0xff] %v1060
        %1125 = vst [vmem:[#allocation2 + $0x1e0] sm:$0xff] %v1061
        %1126 = vst [vmem:[#allocation2 + $0x1e8] sm:$0xff] %v1062
        %1127 = vst [vmem:[#allocation2 + $0x1f0] sm:$0xff] %v1063
        %1128 = vst [vmem:[#allocation2 + $0x1f8] sm:$0xff] %v1064
        // Predicated region
        $region37: #{tpu_custom_call.1} parent=31 // pred_check
          %p1129 = pneg %p260
        $region38: #{tpu_custom_call.1} parent=31 // pred_check_branch
          %1131 = sbr.rel (%p1129) target = $region40
        $region39: #{tpu_custom_call.1} parent=31 // pred_region
          %v1132 = vld [vmem:[#allocation2] sm:$0xff]
          %v1133 = vld [vmem:[#allocation2 + $0x8] sm:$0xff]
          %v1134 = vld [vmem:[#allocation2 + $0x10] sm:$0xff]
          %v1135 = vld [vmem:[#allocation2 + $0x18] sm:$0xff]
          %v1136 = vld [vmem:[#allocation2 + $0x20] sm:$0xff]
          %v1137 = vld [vmem:[#allocation2 + $0x28] sm:$0xff]
          %v1138 = vld [vmem:[#allocation2 + $0x30] sm:$0xff]
          %v1139 = vld [vmem:[#allocation2 + $0x38] sm:$0xff]
          %v1140 = vld [vmem:[#allocation2 + $0x40] sm:$0xff]
          %v1141 = vld [vmem:[#allocation2 + $0x48] sm:$0xff]
          %v1142 = vld [vmem:[#allocation2 + $0x50] sm:$0xff]
          %v1143 = vld [vmem:[#allocation2 + $0x58] sm:$0xff]
          %v1144 = vld [vmem:[#allocation2 + $0x60] sm:$0xff]
          %v1145 = vld [vmem:[#allocation2 + $0x68] sm:$0xff]
          %v1146 = vld [vmem:[#allocation2 + $0x70] sm:$0xff]
          %v1147 = vld [vmem:[#allocation2 + $0x78] sm:$0xff]
          %v1148 = vld [vmem:[#allocation2 + $0x80] sm:$0xff]
          %v1149 = vld [vmem:[#allocation2 + $0x88] sm:$0xff]
          %v1150 = vld [vmem:[#allocation2 + $0x90] sm:$0xff]
          %v1151 = vld [vmem:[#allocation2 + $0x98] sm:$0xff]
          %v1152 = vld [vmem:[#allocation2 + $0xa0] sm:$0xff]
          %v1153 = vld [vmem:[#allocation2 + $0xa8] sm:$0xff]
          %v1154 = vld [vmem:[#allocation2 + $0xb0] sm:$0xff]
          %v1155 = vld [vmem:[#allocation2 + $0xb8] sm:$0xff]
          %v1156 = vld [vmem:[#allocation2 + $0xc0] sm:$0xff]
          %v1157 = vld [vmem:[#allocation2 + $0xc8] sm:$0xff]
          %v1158 = vld [vmem:[#allocation2 + $0xd0] sm:$0xff]
          %v1159 = vld [vmem:[#allocation2 + $0xd8] sm:$0xff]
          %v1160 = vld [vmem:[#allocation2 + $0xe0] sm:$0xff]
          %v1161 = vld [vmem:[#allocation2 + $0xe8] sm:$0xff]
          %v1162 = vld [vmem:[#allocation2 + $0xf0] sm:$0xff]
          %v1163 = vld [vmem:[#allocation2 + $0xf8] sm:$0xff]
          %v1164 = vld [vmem:[#allocation2 + $0x100] sm:$0xff]
          %v1165 = vld [vmem:[#allocation2 + $0x108] sm:$0xff]
          %v1166 = vld [vmem:[#allocation2 + $0x110] sm:$0xff]
          %v1167 = vld [vmem:[#allocation2 + $0x118] sm:$0xff]
          %v1168 = vld [vmem:[#allocation2 + $0x120] sm:$0xff]
          %v1169 = vld [vmem:[#allocation2 + $0x128] sm:$0xff]
          %v1170 = vld [vmem:[#allocation2 + $0x130] sm:$0xff]
          %v1171 = vld [vmem:[#allocation2 + $0x138] sm:$0xff]
          %v1172 = vld [vmem:[#allocation2 + $0x140] sm:$0xff]
          %v1173 = vld [vmem:[#allocation2 + $0x148] sm:$0xff]
          %v1174 = vld [vmem:[#allocation2 + $0x150] sm:$0xff]
          %v1175 = vld [vmem:[#allocation2 + $0x158] sm:$0xff]
          %v1176 = vld [vmem:[#allocation2 + $0x160] sm:$0xff]
          %v1177 = vld [vmem:[#allocation2 + $0x168] sm:$0xff]
          %v1178 = vld [vmem:[#allocation2 + $0x170] sm:$0xff]
          %v1179 = vld [vmem:[#allocation2 + $0x178] sm:$0xff]
          %v1180 = vld [vmem:[#allocation2 + $0x180] sm:$0xff]
          %v1181 = vld [vmem:[#allocation2 + $0x188] sm:$0xff]
          %v1182 = vld [vmem:[#allocation2 + $0x190] sm:$0xff]
          %v1183 = vld [vmem:[#allocation2 + $0x198] sm:$0xff]
          %v1184 = vld [vmem:[#allocation2 + $0x1a0] sm:$0xff]
          %v1185 = vld [vmem:[#allocation2 + $0x1a8] sm:$0xff]
          %v1186 = vld [vmem:[#allocation2 + $0x1b0] sm:$0xff]
          %v1187 = vld [vmem:[#allocation2 + $0x1b8] sm:$0xff]
          %v1188 = vld [vmem:[#allocation2 + $0x1c0] sm:$0xff]
          %v1189 = vld [vmem:[#allocation2 + $0x1c8] sm:$0xff]
          %v1190 = vld [vmem:[#allocation2 + $0x1d0] sm:$0xff]
          %v1191 = vld [vmem:[#allocation2 + $0x1d8] sm:$0xff]
          %v1192 = vld [vmem:[#allocation2 + $0x1e0] sm:$0xff]
          %v1193 = vld [vmem:[#allocation2 + $0x1e8] sm:$0xff]
          %v1194 = vld [vmem:[#allocation2 + $0x1f0] sm:$0xff]
          %v1195 = vld [vmem:[#allocation2 + $0x1f8] sm:$0xff]
          %v1196 = vld [vmem:[%s256] sm:$0xff]
          %v1197 = vld [vmem:[%s256 + $0x8] sm:$0xff]
          %v1198 = vld [vmem:[%s256 + $0x10] sm:$0xff]
          %v1199 = vld [vmem:[%s256 + $0x18] sm:$0xff]
          %v1200 = vld [vmem:[%s256 + $0x20] sm:$0xff]
          %v1201 = vld [vmem:[%s256 + $0x28] sm:$0xff]
          %v1202 = vld [vmem:[%s256 + $0x30] sm:$0xff]
          %v1203 = vld [vmem:[%s256 + $0x38] sm:$0xff]
          %v1204 = vld [vmem:[%s256 + $0x40] sm:$0xff]
          %v1205 = vld [vmem:[%s256 + $0x48] sm:$0xff]
          %v1206 = vld [vmem:[%s256 + $0x50] sm:$0xff]
          %v1207 = vld [vmem:[%s256 + $0x58] sm:$0xff]
          %v1208 = vld [vmem:[%s256 + $0x60] sm:$0xff]
          %v1209 = vld [vmem:[%s256 + $0x68] sm:$0xff]
          %v1210 = vld [vmem:[%s256 + $0x70] sm:$0xff]
          %v1211 = vld [vmem:[%s256 + $0x78] sm:$0xff]
          %v1212 = vld [vmem:[%s256 + $0x80] sm:$0xff]
          %v1213 = vld [vmem:[%s256 + $0x88] sm:$0xff]
          %v1214 = vld [vmem:[%s256 + $0x90] sm:$0xff]
          %v1215 = vld [vmem:[%s256 + $0x98] sm:$0xff]
          %v1216 = vld [vmem:[%s256 + $0xa0] sm:$0xff]
          %v1217 = vld [vmem:[%s256 + $0xa8] sm:$0xff]
          %v1218 = vld [vmem:[%s256 + $0xb0] sm:$0xff]
          %v1219 = vld [vmem:[%s256 + $0xb8] sm:$0xff]
          %v1220 = vld [vmem:[%s256 + $0xc0] sm:$0xff]
          %v1221 = vld [vmem:[%s256 + $0xc8] sm:$0xff]
          %v1222 = vld [vmem:[%s256 + $0xd0] sm:$0xff]
          %v1223 = vld [vmem:[%s256 + $0xd8] sm:$0xff]
          %v1224 = vld [vmem:[%s256 + $0xe0] sm:$0xff]
          %v1225 = vld [vmem:[%s256 + $0xe8] sm:$0xff]
          %v1226 = vld [vmem:[%s256 + $0xf0] sm:$0xff]
          %v1227 = vld [vmem:[%s256 + $0xf8] sm:$0xff]
          %v1228 = vld [vmem:[%s256 + $0x100] sm:$0xff]
          %v1229 = vld [vmem:[%s256 + $0x108] sm:$0xff]
          %v1230 = vld [vmem:[%s256 + $0x110] sm:$0xff]
          %v1231 = vld [vmem:[%s256 + $0x118] sm:$0xff]
          %v1232 = vld [vmem:[%s256 + $0x120] sm:$0xff]
          %v1233 = vld [vmem:[%s256 + $0x128] sm:$0xff]
          %v1234 = vld [vmem:[%s256 + $0x130] sm:$0xff]
          %v1235 = vld [vmem:[%s256 + $0x138] sm:$0xff]
          %v1236 = vld [vmem:[%s256 + $0x140] sm:$0xff]
          %v1237 = vld [vmem:[%s256 + $0x148] sm:$0xff]
          %v1238 = vld [vmem:[%s256 + $0x150] sm:$0xff]
          %v1239 = vld [vmem:[%s256 + $0x158] sm:$0xff]
          %v1240 = vld [vmem:[%s256 + $0x160] sm:$0xff]
          %v1241 = vld [vmem:[%s256 + $0x168] sm:$0xff]
          %v1242 = vld [vmem:[%s256 + $0x170] sm:$0xff]
          %v1243 = vld [vmem:[%s256 + $0x178] sm:$0xff]
          %v1244 = vld [vmem:[%s256 + $0x180] sm:$0xff]
          %v1245 = vld [vmem:[%s256 + $0x188] sm:$0xff]
          %v1246 = vld [vmem:[%s256 + $0x190] sm:$0xff]
          %v1247 = vld [vmem:[%s256 + $0x198] sm:$0xff]
          %v1248 = vld [vmem:[%s256 + $0x1a0] sm:$0xff]
          %v1249 = vld [vmem:[%s256 + $0x1a8] sm:$0xff]
          %v1250 = vld [vmem:[%s256 + $0x1b0] sm:$0xff]
          %v1251 = vld [vmem:[%s256 + $0x1b8] sm:$0xff]
          %v1252 = vld [vmem:[%s256 + $0x1c0] sm:$0xff]
          %v1253 = vld [vmem:[%s256 + $0x1c8] sm:$0xff]
          %v1254 = vld [vmem:[%s256 + $0x1d0] sm:$0xff]
          %v1255 = vld [vmem:[%s256 + $0x1d8] sm:$0xff]
          %v1256 = vld [vmem:[%s256 + $0x1e0] sm:$0xff]
          %v1257 = vld [vmem:[%s256 + $0x1e8] sm:$0xff]
          %v1258 = vld [vmem:[%s256 + $0x1f0] sm:$0xff]
          %v1259 = vld [vmem:[%s256 + $0x1f8] sm:$0xff]
          %1261 = vset.pattern.permute.xlu0 0
          %1262 = vperm.xlu0 %1261, %v1196
          %v1263 = vpop.permute.xlu0 %1262
          %1266 = vset.pattern.permute.xlu0 0
          %1267 = vperm.xlu0 %1266, %v1197
          %v1268 = vpop.permute.xlu0 %1267
          %1271 = vset.pattern.permute.xlu0 0
          %1272 = vperm.xlu0 %1271, %v1198
          %v1273 = vpop.permute.xlu0 %1272
          %1276 = vset.pattern.permute.xlu0 0
          %1277 = vperm.xlu0 %1276, %v1199
          %v1278 = vpop.permute.xlu0 %1277
          %1281 = vset.pattern.permute.xlu0 0
          %1282 = vperm.xlu0 %1281, %v1200
          %v1283 = vpop.permute.xlu0 %1282
          %1286 = vset.pattern.permute.xlu0 0
          %1287 = vperm.xlu0 %1286, %v1201
          %v1288 = vpop.permute.xlu0 %1287
          %1291 = vset.pattern.permute.xlu0 0
          %1292 = vperm.xlu0 %1291, %v1202
          %v1293 = vpop.permute.xlu0 %1292
          %1296 = vset.pattern.permute.xlu0 0
          %1297 = vperm.xlu0 %1296, %v1203
          %v1298 = vpop.permute.xlu0 %1297
          %1301 = vset.pattern.permute.xlu0 0
          %1302 = vperm.xlu0 %1301, %v1204
          %v1303 = vpop.permute.xlu0 %1302
          %1306 = vset.pattern.permute.xlu0 0
          %1307 = vperm.xlu0 %1306, %v1205
          %v1308 = vpop.permute.xlu0 %1307
          %1311 = vset.pattern.permute.xlu0 0
          %1312 = vperm.xlu0 %1311, %v1206
          %v1313 = vpop.permute.xlu0 %1312
          %1316 = vset.pattern.permute.xlu0 0
          %1317 = vperm.xlu0 %1316, %v1207
          %v1318 = vpop.permute.xlu0 %1317
          %1321 = vset.pattern.permute.xlu0 0
          %1322 = vperm.xlu0 %1321, %v1208
          %v1323 = vpop.permute.xlu0 %1322
          %1326 = vset.pattern.permute.xlu0 0
          %1327 = vperm.xlu0 %1326, %v1209
          %v1328 = vpop.permute.xlu0 %1327
          %1331 = vset.pattern.permute.xlu0 0
          %1332 = vperm.xlu0 %1331, %v1210
          %v1333 = vpop.permute.xlu0 %1332
          %1336 = vset.pattern.permute.xlu0 0
          %1337 = vperm.xlu0 %1336, %v1211
          %v1338 = vpop.permute.xlu0 %1337
          %1341 = vset.pattern.permute.xlu0 0
          %1342 = vperm.xlu0 %1341, %v1212
          %v1343 = vpop.permute.xlu0 %1342
          %1346 = vset.pattern.permute.xlu0 0
          %1347 = vperm.xlu0 %1346, %v1213
          %v1348 = vpop.permute.xlu0 %1347
          %1351 = vset.pattern.permute.xlu0 0
          %1352 = vperm.xlu0 %1351, %v1214
          %v1353 = vpop.permute.xlu0 %1352
          %1356 = vset.pattern.permute.xlu0 0
          %1357 = vperm.xlu0 %1356, %v1215
          %v1358 = vpop.permute.xlu0 %1357
          %1361 = vset.pattern.permute.xlu0 0
          %1362 = vperm.xlu0 %1361, %v1216
          %v1363 = vpop.permute.xlu0 %1362
          %1366 = vset.pattern.permute.xlu0 0
          %1367 = vperm.xlu0 %1366, %v1217
          %v1368 = vpop.permute.xlu0 %1367
          %1371 = vset.pattern.permute.xlu0 0
          %1372 = vperm.xlu0 %1371, %v1218
          %v1373 = vpop.permute.xlu0 %1372
          %1376 = vset.pattern.permute.xlu0 0
          %1377 = vperm.xlu0 %1376, %v1219
          %v1378 = vpop.permute.xlu0 %1377
          %1381 = vset.pattern.permute.xlu0 0
          %1382 = vperm.xlu0 %1381, %v1220
          %v1383 = vpop.permute.xlu0 %1382
          %1386 = vset.pattern.permute.xlu0 0
          %1387 = vperm.xlu0 %1386, %v1221
          %v1388 = vpop.permute.xlu0 %1387
          %1391 = vset.pattern.permute.xlu0 0
          %1392 = vperm.xlu0 %1391, %v1222
          %v1393 = vpop.permute.xlu0 %1392
          %1396 = vset.pattern.permute.xlu0 0
          %1397 = vperm.xlu0 %1396, %v1223
          %v1398 = vpop.permute.xlu0 %1397
          %1401 = vset.pattern.permute.xlu0 0
          %1402 = vperm.xlu0 %1401, %v1224
          %v1403 = vpop.permute.xlu0 %1402
          %1406 = vset.pattern.permute.xlu0 0
          %1407 = vperm.xlu0 %1406, %v1225
          %v1408 = vpop.permute.xlu0 %1407
          %1411 = vset.pattern.permute.xlu0 0
          %1412 = vperm.xlu0 %1411, %v1226
          %v1413 = vpop.permute.xlu0 %1412
          %1416 = vset.pattern.permute.xlu0 0
          %1417 = vperm.xlu0 %1416, %v1227
          %v1418 = vpop.permute.xlu0 %1417
          %1421 = vset.pattern.permute.xlu0 0
          %1422 = vperm.xlu0 %1421, %v1228
          %v1423 = vpop.permute.xlu0 %1422
          %1426 = vset.pattern.permute.xlu0 0
          %1427 = vperm.xlu0 %1426, %v1229
          %v1428 = vpop.permute.xlu0 %1427
          %1431 = vset.pattern.permute.xlu0 0
          %1432 = vperm.xlu0 %1431, %v1230
          %v1433 = vpop.permute.xlu0 %1432
          %1436 = vset.pattern.permute.xlu0 0
          %1437 = vperm.xlu0 %1436, %v1231
          %v1438 = vpop.permute.xlu0 %1437
          %1441 = vset.pattern.permute.xlu0 0
          %1442 = vperm.xlu0 %1441, %v1232
          %v1443 = vpop.permute.xlu0 %1442
          %1446 = vset.pattern.permute.xlu0 0
          %1447 = vperm.xlu0 %1446, %v1233
          %v1448 = vpop.permute.xlu0 %1447
          %1451 = vset.pattern.permute.xlu0 0
          %1452 = vperm.xlu0 %1451, %v1234
          %v1453 = vpop.permute.xlu0 %1452
          %1456 = vset.pattern.permute.xlu0 0
          %1457 = vperm.xlu0 %1456, %v1235
          %v1458 = vpop.permute.xlu0 %1457
          %1461 = vset.pattern.permute.xlu0 0
          %1462 = vperm.xlu0 %1461, %v1236
          %v1463 = vpop.permute.xlu0 %1462
          %1466 = vset.pattern.permute.xlu0 0
          %1467 = vperm.xlu0 %1466, %v1237
          %v1468 = vpop.permute.xlu0 %1467
          %1471 = vset.pattern.permute.xlu0 0
          %1472 = vperm.xlu0 %1471, %v1238
          %v1473 = vpop.permute.xlu0 %1472
          %1476 = vset.pattern.permute.xlu0 0
          %1477 = vperm.xlu0 %1476, %v1239
          %v1478 = vpop.permute.xlu0 %1477
          %1481 = vset.pattern.permute.xlu0 0
          %1482 = vperm.xlu0 %1481, %v1240
          %v1483 = vpop.permute.xlu0 %1482
          %1486 = vset.pattern.permute.xlu0 0
          %1487 = vperm.xlu0 %1486, %v1241
          %v1488 = vpop.permute.xlu0 %1487
          %1491 = vset.pattern.permute.xlu0 0
          %1492 = vperm.xlu0 %1491, %v1242
          %v1493 = vpop.permute.xlu0 %1492
          %1496 = vset.pattern.permute.xlu0 0
          %1497 = vperm.xlu0 %1496, %v1243
          %v1498 = vpop.permute.xlu0 %1497
          %1501 = vset.pattern.permute.xlu0 0
          %1502 = vperm.xlu0 %1501, %v1244
          %v1503 = vpop.permute.xlu0 %1502
          %1506 = vset.pattern.permute.xlu0 0
          %1507 = vperm.xlu0 %1506, %v1245
          %v1508 = vpop.permute.xlu0 %1507
          %1511 = vset.pattern.permute.xlu0 0
          %1512 = vperm.xlu0 %1511, %v1246
          %v1513 = vpop.permute.xlu0 %1512
          %1516 = vset.pattern.permute.xlu0 0
          %1517 = vperm.xlu0 %1516, %v1247
          %v1518 = vpop.permute.xlu0 %1517
          %1521 = vset.pattern.permute.xlu0 0
          %1522 = vperm.xlu0 %1521, %v1248
          %v1523 = vpop.permute.xlu0 %1522
          %1526 = vset.pattern.permute.xlu0 0
          %1527 = vperm.xlu0 %1526, %v1249
          %v1528 = vpop.permute.xlu0 %1527
          %1531 = vset.pattern.permute.xlu0 0
          %1532 = vperm.xlu0 %1531, %v1250
          %v1533 = vpop.permute.xlu0 %1532
          %1536 = vset.pattern.permute.xlu0 0
          %1537 = vperm.xlu0 %1536, %v1251
          %v1538 = vpop.permute.xlu0 %1537
          %1541 = vset.pattern.permute.xlu0 0
          %1542 = vperm.xlu0 %1541, %v1252
          %v1543 = vpop.permute.xlu0 %1542
          %1546 = vset.pattern.permute.xlu0 0
          %1547 = vperm.xlu0 %1546, %v1253
          %v1548 = vpop.permute.xlu0 %1547
          %1551 = vset.pattern.permute.xlu0 0
          %1552 = vperm.xlu0 %1551, %v1254
          %v1553 = vpop.permute.xlu0 %1552
          %1556 = vset.pattern.permute.xlu0 0
          %1557 = vperm.xlu0 %1556, %v1255
          %v1558 = vpop.permute.xlu0 %1557
          %1561 = vset.pattern.permute.xlu0 0
          %1562 = vperm.xlu0 %1561, %v1256
          %v1563 = vpop.permute.xlu0 %1562
          %1566 = vset.pattern.permute.xlu0 0
          %1567 = vperm.xlu0 %1566, %v1257
          %v1568 = vpop.permute.xlu0 %1567
          %1571 = vset.pattern.permute.xlu0 0
          %1572 = vperm.xlu0 %1571, %v1258
          %v1573 = vpop.permute.xlu0 %1572
          %1576 = vset.pattern.permute.xlu0 0
          %1577 = vperm.xlu0 %1576, %v1259
          %v1578 = vpop.permute.xlu0 %1577
          %v1580 = vmul.f32 %v1132, %v1263
          %v1581 = vmul.f32 %v1133, %v1268
          %v1582 = vmul.f32 %v1134, %v1273
          %v1583 = vmul.f32 %v1135, %v1278
          %v1584 = vmul.f32 %v1136, %v1283
          %v1585 = vmul.f32 %v1137, %v1288
          %v1586 = vmul.f32 %v1138, %v1293
          %v1587 = vmul.f32 %v1139, %v1298
          %v1588 = vmul.f32 %v1140, %v1303
          %v1589 = vmul.f32 %v1141, %v1308
          %v1590 = vmul.f32 %v1142, %v1313
          %v1591 = vmul.f32 %v1143, %v1318
          %v1592 = vmul.f32 %v1144, %v1323
          %v1593 = vmul.f32 %v1145, %v1328
          %v1594 = vmul.f32 %v1146, %v1333
          %v1595 = vmul.f32 %v1147, %v1338
          %v1596 = vmul.f32 %v1148, %v1343
          %v1597 = vmul.f32 %v1149, %v1348
          %v1598 = vmul.f32 %v1150, %v1353
          %v1599 = vmul.f32 %v1151, %v1358
          %v1600 = vmul.f32 %v1152, %v1363
          %v1601 = vmul.f32 %v1153, %v1368
          %v1602 = vmul.f32 %v1154, %v1373
          %v1603 = vmul.f32 %v1155, %v1378
          %v1604 = vmul.f32 %v1156, %v1383
          %v1605 = vmul.f32 %v1157, %v1388
          %v1606 = vmul.f32 %v1158, %v1393
          %v1607 = vmul.f32 %v1159, %v1398
          %v1608 = vmul.f32 %v1160, %v1403
          %v1609 = vmul.f32 %v1161, %v1408
          %v1610 = vmul.f32 %v1162, %v1413
          %v1611 = vmul.f32 %v1163, %v1418
          %v1612 = vmul.f32 %v1164, %v1423
          %v1613 = vmul.f32 %v1165, %v1428
          %v1614 = vmul.f32 %v1166, %v1433
          %v1615 = vmul.f32 %v1167, %v1438
          %v1616 = vmul.f32 %v1168, %v1443
          %v1617 = vmul.f32 %v1169, %v1448
          %v1618 = vmul.f32 %v1170, %v1453
          %v1619 = vmul.f32 %v1171, %v1458
          %v1620 = vmul.f32 %v1172, %v1463
          %v1621 = vmul.f32 %v1173, %v1468
          %v1622 = vmul.f32 %v1174, %v1473
          %v1623 = vmul.f32 %v1175, %v1478
          %v1624 = vmul.f32 %v1176, %v1483
          %v1625 = vmul.f32 %v1177, %v1488
          %v1626 = vmul.f32 %v1178, %v1493
          %v1627 = vmul.f32 %v1179, %v1498
          %v1628 = vmul.f32 %v1180, %v1503
          %v1629 = vmul.f32 %v1181, %v1508
          %v1630 = vmul.f32 %v1182, %v1513
          %v1631 = vmul.f32 %v1183, %v1518
          %v1632 = vmul.f32 %v1184, %v1523
          %v1633 = vmul.f32 %v1185, %v1528
          %v1634 = vmul.f32 %v1186, %v1533
          %v1635 = vmul.f32 %v1187, %v1538
          %v1636 = vmul.f32 %v1188, %v1543
          %v1637 = vmul.f32 %v1189, %v1548
          %v1638 = vmul.f32 %v1190, %v1553
          %v1639 = vmul.f32 %v1191, %v1558
          %v1640 = vmul.f32 %v1192, %v1563
          %v1641 = vmul.f32 %v1193, %v1568
          %v1642 = vmul.f32 %v1194, %v1573
          %v1643 = vmul.f32 %v1195, %v1578
          %v1644 = vmax.f32 %v1580, 0.0
          %v1645 = vmax.f32 %v1581, 0.0
          %v1646 = vmax.f32 %v1582, 0.0
          %v1647 = vmax.f32 %v1583, 0.0
          %v1648 = vmax.f32 %v1584, 0.0
          %v1649 = vmax.f32 %v1585, 0.0
          %v1650 = vmax.f32 %v1586, 0.0
          %v1651 = vmax.f32 %v1587, 0.0
          %v1652 = vmax.f32 %v1588, 0.0
          %v1653 = vmax.f32 %v1589, 0.0
          %v1654 = vmax.f32 %v1590, 0.0
          %v1655 = vmax.f32 %v1591, 0.0
          %v1656 = vmax.f32 %v1592, 0.0
          %v1657 = vmax.f32 %v1593, 0.0
          %v1658 = vmax.f32 %v1594, 0.0
          %v1659 = vmax.f32 %v1595, 0.0
          %v1660 = vmax.f32 %v1596, 0.0
          %v1661 = vmax.f32 %v1597, 0.0
          %v1662 = vmax.f32 %v1598, 0.0
          %v1663 = vmax.f32 %v1599, 0.0
          %v1664 = vmax.f32 %v1600, 0.0
          %v1665 = vmax.f32 %v1601, 0.0
          %v1666 = vmax.f32 %v1602, 0.0
          %v1667 = vmax.f32 %v1603, 0.0
          %v1668 = vmax.f32 %v1604, 0.0
          %v1669 = vmax.f32 %v1605, 0.0
          %v1670 = vmax.f32 %v1606, 0.0
          %v1671 = vmax.f32 %v1607, 0.0
          %v1672 = vmax.f32 %v1608, 0.0
          %v1673 = vmax.f32 %v1609, 0.0
          %v1674 = vmax.f32 %v1610, 0.0
          %v1675 = vmax.f32 %v1611, 0.0
          %v1676 = vmax.f32 %v1612, 0.0
          %v1677 = vmax.f32 %v1613, 0.0
          %v1678 = vmax.f32 %v1614, 0.0
          %v1679 = vmax.f32 %v1615, 0.0
          %v1680 = vmax.f32 %v1616, 0.0
          %v1681 = vmax.f32 %v1617, 0.0
          %v1682 = vmax.f32 %v1618, 0.0
          %v1683 = vmax.f32 %v1619, 0.0
          %v1684 = vmax.f32 %v1620, 0.0
          %v1685 = vmax.f32 %v1621, 0.0
          %v1686 = vmax.f32 %v1622, 0.0
          %v1687 = vmax.f32 %v1623, 0.0
          %v1688 = vmax.f32 %v1624, 0.0
          %v1689 = vmax.f32 %v1625, 0.0
          %v1690 = vmax.f32 %v1626, 0.0
          %v1691 = vmax.f32 %v1627, 0.0
          %v1692 = vmax.f32 %v1628, 0.0
          %v1693 = vmax.f32 %v1629, 0.0
          %v1694 = vmax.f32 %v1630, 0.0
          %v1695 = vmax.f32 %v1631, 0.0
          %v1696 = vmax.f32 %v1632, 0.0
          %v1697 = vmax.f32 %v1633, 0.0
          %v1698 = vmax.f32 %v1634, 0.0
          %v1699 = vmax.f32 %v1635, 0.0
          %v1700 = vmax.f32 %v1636, 0.0
          %v1701 = vmax.f32 %v1637, 0.0
          %v1702 = vmax.f32 %v1638, 0.0
          %v1703 = vmax.f32 %v1639, 0.0
          %v1704 = vmax.f32 %v1640, 0.0
          %v1705 = vmax.f32 %v1641, 0.0
          %v1706 = vmax.f32 %v1642, 0.0
          %v1707 = vmax.f32 %v1643, 0.0
          %1708 = vst [vmem:[%s233] sm:$0xff] %v1644
          %1709 = vst [vmem:[%s233 + $0x8] sm:$0xff] %v1645
          %1710 = vst [vmem:[%s233 + $0x10] sm:$0xff] %v1646
          %1711 = vst [vmem:[%s233 + $0x18] sm:$0xff] %v1647
          %1712 = vst [vmem:[%s233 + $0x20] sm:$0xff] %v1648
          %1713 = vst [vmem:[%s233 + $0x28] sm:$0xff] %v1649
          %1714 = vst [vmem:[%s233 + $0x30] sm:$0xff] %v1650
          %1715 = vst [vmem:[%s233 + $0x38] sm:$0xff] %v1651
          %1716 = vst [vmem:[%s233 + $0x40] sm:$0xff] %v1652
          %1717 = vst [vmem:[%s233 + $0x48] sm:$0xff] %v1653
          %1718 = vst [vmem:[%s233 + $0x50] sm:$0xff] %v1654
          %1719 = vst [vmem:[%s233 + $0x58] sm:$0xff] %v1655
          %1720 = vst [vmem:[%s233 + $0x60] sm:$0xff] %v1656
          %1721 = vst [vmem:[%s233 + $0x68] sm:$0xff] %v1657
          %1722 = vst [vmem:[%s233 + $0x70] sm:$0xff] %v1658
          %1723 = vst [vmem:[%s233 + $0x78] sm:$0xff] %v1659
          %1724 = vst [vmem:[%s233 + $0x80] sm:$0xff] %v1660
          %1725 = vst [vmem:[%s233 + $0x88] sm:$0xff] %v1661
          %1726 = vst [vmem:[%s233 + $0x90] sm:$0xff] %v1662
          %1727 = vst [vmem:[%s233 + $0x98] sm:$0xff] %v1663
          %1728 = vst [vmem:[%s233 + $0xa0] sm:$0xff] %v1664
          %1729 = vst [vmem:[%s233 + $0xa8] sm:$0xff] %v1665
          %1730 = vst [vmem:[%s233 + $0xb0] sm:$0xff] %v1666
          %1731 = vst [vmem:[%s233 + $0xb8] sm:$0xff] %v1667
          %1732 = vst [vmem:[%s233 + $0xc0] sm:$0xff] %v1668
          %1733 = vst [vmem:[%s233 + $0xc8] sm:$0xff] %v1669
          %1734 = vst [vmem:[%s233 + $0xd0] sm:$0xff] %v1670
          %1735 = vst [vmem:[%s233 + $0xd8] sm:$0xff] %v1671
          %1736 = vst [vmem:[%s233 + $0xe0] sm:$0xff] %v1672
          %1737 = vst [vmem:[%s233 + $0xe8] sm:$0xff] %v1673
          %1738 = vst [vmem:[%s233 + $0xf0] sm:$0xff] %v1674
          %1739 = vst [vmem:[%s233 + $0xf8] sm:$0xff] %v1675
          %1740 = vst [vmem:[%s233 + $0x100] sm:$0xff] %v1676
          %1741 = vst [vmem:[%s233 + $0x108] sm:$0xff] %v1677
          %1742 = vst [vmem:[%s233 + $0x110] sm:$0xff] %v1678
          %1743 = vst [vmem:[%s233 + $0x118] sm:$0xff] %v1679
          %1744 = vst [vmem:[%s233 + $0x120] sm:$0xff] %v1680
          %1745 = vst [vmem:[%s233 + $0x128] sm:$0xff] %v1681
          %1746 = vst [vmem:[%s233 + $0x130] sm:$0xff] %v1682
          %1747 = vst [vmem:[%s233 + $0x138] sm:$0xff] %v1683
          %1748 = vst [vmem:[%s233 + $0x140] sm:$0xff] %v1684
          %1749 = vst [vmem:[%s233 + $0x148] sm:$0xff] %v1685
          %1750 = vst [vmem:[%s233 + $0x150] sm:$0xff] %v1686
          %1751 = vst [vmem:[%s233 + $0x158] sm:$0xff] %v1687
          %1752 = vst [vmem:[%s233 + $0x160] sm:$0xff] %v1688
          %1753 = vst [vmem:[%s233 + $0x168] sm:$0xff] %v1689
          %1754 = vst [vmem:[%s233 + $0x170] sm:$0xff] %v1690
          %1755 = vst [vmem:[%s233 + $0x178] sm:$0xff] %v1691
          %1756 = vst [vmem:[%s233 + $0x180] sm:$0xff] %v1692
          %1757 = vst [vmem:[%s233 + $0x188] sm:$0xff] %v1693
          %1758 = vst [vmem:[%s233 + $0x190] sm:$0xff] %v1694
          %1759 = vst [vmem:[%s233 + $0x198] sm:$0xff] %v1695
          %1760 = vst [vmem:[%s233 + $0x1a0] sm:$0xff] %v1696
          %1761 = vst [vmem:[%s233 + $0x1a8] sm:$0xff] %v1697
          %1762 = vst [vmem:[%s233 + $0x1b0] sm:$0xff] %v1698
          %1763 = vst [vmem:[%s233 + $0x1b8] sm:$0xff] %v1699
          %1764 = vst [vmem:[%s233 + $0x1c0] sm:$0xff] %v1700
          %1765 = vst [vmem:[%s233 + $0x1c8] sm:$0xff] %v1701
          %1766 = vst [vmem:[%s233 + $0x1d0] sm:$0xff] %v1702
          %1767 = vst [vmem:[%s233 + $0x1d8] sm:$0xff] %v1703
          %1768 = vst [vmem:[%s233 + $0x1e0] sm:$0xff] %v1704
          %1769 = vst [vmem:[%s233 + $0x1e8] sm:$0xff] %v1705
          %1770 = vst [vmem:[%s233 + $0x1f0] sm:$0xff] %v1706
          %1771 = vst [vmem:[%s233 + $0x1f8] sm:$0xff] %v1707
        $region40: #{tpu_custom_call.1} parent=31 // pred_fallthru
          _
        %s1772 = sand.u32 %s128, 1
        %s1773 = scalar_lea.sflag [#allocation4], %s1772
        %s1774 = sand.u32 %s128, 1
        %s1775 = smul.addr %s1774, 512
        %s1776 = scalar_lea.vmem [#allocation3], %s1775
        // Predicated region
        $region41: #{tpu_custom_call.1} parent=31 // pred_check
          %p1777 = pneg %p138
        $region42: #{tpu_custom_call.1} parent=31 // pred_check_branch
          %1779 = sbr.rel (%p1777) target = $region44
        $region43: #{tpu_custom_call.1} parent=31 // pred_region
          %s1780 = smul.u32 64, %s22
          %s1782 = ssub.s32 8192, 8192
          %1783 = vsyncadd %s1773, %s1782
          %s1784 = sadd.s32 %s23, %s1780
          %s1785 = smul.addr %s1784, 128
          %s1786 = scalar_lea.hbm %s3, %s1785
          %s1787 = sshll.u32 %s1776, 4
          %s1788 = int_to_ptr.vmem [resolvable:$true] %s1787
          %1793 = dma.vmem_to_hbm [thread:$0]  %s1788, 8192, %s1786, %s1773, 128, 128, 8
        $region44: #{tpu_custom_call.1} parent=31 // pred_fallthru
          _
      $region32: #{tpu_custom_call.1} parent=5 // pred_fallthru
        _
      %p1794 = scmp.le.s32.totalorder 2, %s12
      // Predicated region
      $region45: #{tpu_custom_call.1} parent=5 // pred_check
        %p1795 = pneg %p1794
      $region46: #{tpu_custom_call.1} parent=5 // pred_check_branch
        %1797 = sbr.rel (%p1795) target = $region48
      $region47: #{tpu_custom_call.1} parent=5 // pred_region
        %s1798 = ssub.s32 %s12, 2
        // Predicated region
        $region49: #{tpu_custom_call.1} parent=47 // pred_check
          %p1799 = pneg %p144
        $region50: #{tpu_custom_call.1} parent=47 // pred_check_branch
          %1801 = sbr.rel (%p1799) target = $region52
        $region51: #{tpu_custom_call.1} parent=47 // pred_region
          %s1802 = sand.u32 %s129, 1
          %s1803 = scalar_lea.sflag [#allocation4], %s1802
          %s1804 = sand.u32 %s129, 1
          %s1805 = smul.addr %s1804, 512
          %s1806 = scalar_lea.vmem [#allocation3], %s1805
          %1807 = dma.done %s1803, 8192
        $region52: #{tpu_custom_call.1} parent=47 // pred_fallthru
          _
      $region48: #{tpu_custom_call.1} parent=5 // pred_fallthru
        _
    $region6: #{tpu_custom_call.1} parent=1 // loop_footer
      %s16 = sadd.s32 1, %s12
    $region7: #{tpu_custom_call.1} parent=1 // loop_footer_branch
      %11 = sbr.rel target = $region3
    $region8: #{tpu_custom_call.1} parent=1 // loop_exit
      _
    %1808 = vsyncpa [#allocation4], 1
    %s1809 = scalar_lea.sflag [#allocation4], 1
    %1810 = vsyncpa %s1809, 1

</llo_original>
